<compile_context>
chip_gen: v6e
topology: v6e:2x2x1
jax: 0.10.0
libtpu: 0.0.40
codegen_flags: <defaults>
</compile_context>

<pallas_src>
import jax
import jax.numpy as jnp
from jax import lax
from jax.experimental import pallas as pl
from jax.experimental.pallas import tpu as pltpu

INPUT_DIM = 32
HIDDEN_DIM = 128
OUTPUT_DIM = 256
LN_EPS = 1e-5


def _gelu_exact(x):
    # Matches torch.nn.functional.gelu default (erf-based, not tanh approx).
    return 0.5 * x * (1.0 + lax.erf(x * 0.7071067811865476))


def _layer_norm_f32(x, gamma, beta, eps):
    # Biased variance, like nn.LayerNorm. Statistics in f32. (Reference only.)
    x = x.astype(jnp.float32)
    mean = jnp.mean(x, axis=-1, keepdims=True)
    centered = x - mean
    var = jnp.mean(centered * centered, axis=-1, keepdims=True)
    inv = lax.rsqrt(var + eps)
    return centered * inv * gamma.astype(jnp.float32) + beta.astype(jnp.float32)


def temporal_encoder_kernel(
    x_ref,    # (TR, INPUT_DIM)
    w1_ref,   # (INPUT_DIM, HIDDEN_DIM)
    b1_ref,   # (1, HIDDEN_DIM)          fc1 bias (f32)
    w2_ref,   # (HIDDEN_DIM, OUTPUT_DIM) fc2 weight with LN1 gamma folded in
    v2_ref,   # (3, OUTPUT_DIM)          rows: [b2'(=b2+be1@w2), gamma2, beta2] (f32)
    o_ref,    # (TR, OUTPUT_DIM)
):
    f32 = jnp.float32
    # f32 operands -> exact f32 MXU math (multi-pass, hidden under HBM traffic);
    # bf16 operands -> native single-pass bf16 MXU.
    prec1 = (lax.Precision.HIGHEST
             if x_ref.dtype == f32 and w1_ref.dtype == f32
             else lax.Precision.DEFAULT)
    prec2 = (lax.Precision.HIGHEST
             if w2_ref.dtype == f32
             else lax.Precision.DEFAULT)

    # fc1 (+bias) -> exact GELU, f32 accumulate.
    h = jnp.dot(x_ref[...], w1_ref[...],
                preferred_element_type=f32, precision=prec1)
    h = _gelu_exact(h + b1_ref[...].astype(f32))

    # LayerNorm1 WITHOUT affine: gamma1/beta1 were folded into w2/b2 on the host.
    mean1 = jnp.mean(h, axis=-1, keepdims=True)
    c1 = h - mean1
    var1 = jnp.mean(c1 * c1, axis=-1, keepdims=True)
    h = c1 * lax.rsqrt(var1 + LN_EPS)

    # Dropout(p=0.1) is identity in eval/inference mode.
    # TODO(synk): training-mode dropout (pltpu.prng_seed / prng_random_bits) not implemented.

    # fc2: feed the MXU in the weight dtype (bf16 if weights are bf16).
    y = jnp.dot(h.astype(w2_ref.dtype), w2_ref[...],
                preferred_element_type=f32, precision=prec2)
    v2 = v2_ref[...].astype(f32)
    y = y + v2[0:1, :]                       # folded bias b2'

    # LayerNorm2 (f32 math, with affine).
    mean2 = jnp.mean(y, axis=-1, keepdims=True)
    c2 = y - mean2
    var2 = jnp.mean(c2 * c2, axis=-1, keepdims=True)
    y = c2 * lax.rsqrt(var2 + LN_EPS) * v2[1:2, :] + v2[2:3, :]

    o_ref[...] = y.astype(o_ref.dtype)


def _round_up(n, m):
    return (n + m - 1) // m * m


def temporal_encoder(x, params, *, tile_rows=2048, out_dtype=None,
                     vmem_limit_bytes=32 * 1024 * 1024):
    """x: (..., INPUT_DIM) -> (..., OUTPUT_DIM).

    tile_rows: target rows per grid step (default 2048; sweep 1024-4096 on
    v6e/v7x, keep <=2048 on v5e or raise vmem_limit_bytes). The tile shrinks
    automatically for tiny inputs, rows are NOT padded on the host: the ragged
    last block's writeback is masked by Pallas.
    """
    w1, b1, g1, be1, w2, b2, g2, be2 = params
    if out_dtype is None:
        out_dtype = x.dtype
    f32 = jnp.float32

    # Host-side fold of LayerNorm1's affine into fc2 (exact because dropout is
    # identity in eval): (n * g1 + be1) @ w2 + b2 == n @ (g1^T * w2) + (be1 @ w2 + b2).
    w2f = (g1.astype(f32).reshape(HIDDEN_DIM, 1) * w2.astype(f32)).astype(w2.dtype)
    b2f = b2.astype(f32) + be1.astype(f32) @ w2.astype(f32)
    # Pack remaining small vectors into one (3, OUTPUT_DIM) f32 operand.
    vec2 = jnp.concatenate([b2f, g2.astype(f32), be2.astype(f32)], axis=0)
    b1f = b1.astype(f32)

    lead_shape = x.shape[:-1]
    n_rows = 1
    for d in lead_shape:
        n_rows *= d
    x2 = x.reshape(n_rows, INPUT_DIM)

    # Row tile: multiple of 8, shrinks for small inputs, decoupled from n_rows.
    # Note: the (tile, 32) input block lane-pads to 128 lanes in VMEM (4x logical
    # bytes) -- accounted for in the VMEM budget, ~1/8 of the output traffic.
    tile = max(8, min(_round_up(tile_rows, 8), _round_up(n_rows, 8)))
    grid = (pl.cdiv(n_rows, tile),)

    row_in = pl.BlockSpec((tile, INPUT_DIM), lambda i: (i, 0))
    row_out = pl.BlockSpec((tile, OUTPUT_DIM), lambda i: (i, 0))

    def const(shape):
        # Constant index_map: block fetched once, stays VMEM-resident across grid.
        return pl.BlockSpec(shape, lambda i: (0, 0))

    out = pl.pallas_call(
        temporal_encoder_kernel,
        out_shape=jax.ShapeDtypeStruct((n_rows, OUTPUT_DIM), out_dtype),
        grid_spec=pltpu.PrefetchScalarGridSpec(
            num_scalar_prefetch=0,
            grid=grid,
            in_specs=[
                row_in,
                const((INPUT_DIM, HIDDEN_DIM)),
                const((1, HIDDEN_DIM)),
                const((HIDDEN_DIM, OUTPUT_DIM)),
                const((3, OUTPUT_DIM)),
            ],
            out_specs=row_out,
        ),
        compiler_params=pltpu.CompilerParams(
            # Row tiles are independent -> shard across TensorCores on v7x.
            dimension_semantics=("parallel",),
            # Matches v6e/v7x defaults; lifts v5e's 16 MiB default so tile=2048 fits.
            vmem_limit_bytes=vmem_limit_bytes,
        ),
    )(x2, w1, b1f, w2f, vec2)

    return out.reshape(*lead_shape, OUTPUT_DIM)


def init_params(key, dtype=jnp.float32):
    k1, k2, k3, k4 = jax.random.split(key, 4)
    # Weights stored as (in, out): y = x @ W + b  (== PyTorch x @ W_pt.T + b).
    w1 = (jax.random.normal(k1, (INPUT_DIM, HIDDEN_DIM), dtype) /
          jnp.sqrt(jnp.asarray(INPUT_DIM, dtype)))
    b1 = jax.random.normal(k2, (1, HIDDEN_DIM), dtype) * 0.01
    g1 = jnp.ones((1, HIDDEN_DIM), dtype)
    be1 = jnp.zeros((1, HIDDEN_DIM), dtype)
    w2 = (jax.random.normal(k3, (HIDDEN_DIM, OUTPUT_DIM), dtype) /
          jnp.sqrt(jnp.asarray(HIDDEN_DIM, dtype)))
    b2 = jax.random.normal(k4, (1, OUTPUT_DIM), dtype) * 0.01
    g2 = jnp.ones((1, OUTPUT_DIM), dtype)
    be2 = jnp.zeros((1, OUTPUT_DIM), dtype)
    return (w1, b1, g1, be1, w2, b2, g2, be2)


def reference(x, params):
    """Pure-JAX reference (matches PyTorch eval-mode forward), true-f32 matmuls."""
    w1, b1, g1, be1, w2, b2, g2, be2 = params
    prec = lax.Precision.HIGHEST
    h = jnp.dot(x, w1, precision=prec) + b1
    h = _gelu_exact(h)
    h = _layer_norm_f32(h, g1, be1, LN_EPS)
    y = jnp.dot(h, w2, precision=prec) + b2
    y = _layer_norm_f32(y, g2, be2, LN_EPS)
    return y


if __name__ == "__main__":
    key = jax.random.PRNGKey(0)
    kx, kp, kb = jax.random.split(key, 3)

    batch, seq = 2, 8  # x: (batch, seq, input_dim=32)
    x = jax.random.normal(kx, (batch, seq, INPUT_DIM), jnp.float32)
    params = init_params(kp, jnp.float32)
    ref = reference(x, params)

    # 1) f32 path (kernel and reference both use exact-f32 matmul precision;
    #    residual differences are reduction-order / erf-impl level).
    out = jax.block_until_ready(temporal_encoder(x, params))
    assert out.shape == (batch, seq, OUTPUT_DIM)
    assert jnp.allclose(out, ref, atol=1e-3, rtol=1e-3), (
        float(jnp.max(jnp.abs(out - ref))))

    # 2) bf16 fast path (bf16 inputs/weights/output -> native bf16 MXU,
    #    ~half the HBM traffic on the dominant output write).
    params_bf16 = tuple(p.astype(jnp.bfloat16) for p in params)
    out_bf16 = jax.block_until_ready(
        temporal_encoder(x.astype(jnp.bfloat16), params_bf16,
                         out_dtype=jnp.bfloat16))
    assert jnp.allclose(out_bf16.astype(jnp.float32), ref,
                        atol=1e-1, rtol=1e-1), (
        float(jnp.max(jnp.abs(out_bf16.astype(jnp.float32) - ref))))

    # 3) Ragged / multi-step grid at the real default tile (2048 rows):
    #    2500 rows -> 2 grid steps, last block only partially valid; the
    #    overhanging rows never get written (no host pad/slice anywhere).
    x_big = jax.random.normal(kb, (5, 500, INPUT_DIM), jnp.float32)
    out_big = jax.block_until_ready(temporal_encoder(x_big, params))
    ref_big = reference(x_big, params)
    assert out_big.shape == (5, 500, OUTPUT_DIM)
    assert jnp.allclose(out_big, ref_big, atol=1e-3, rtol=1e-3), (
        float(jnp.max(jnp.abs(out_big - ref_big))))

    # 4) Small non-divisible row count exercises a single ragged block.
    x_odd = jax.random.normal(kx, (3, 7, INPUT_DIM), jnp.float32)
    out_odd = jax.block_until_ready(temporal_encoder(x_odd, params))
    ref_odd = reference(x_odd, params)
    assert out_odd.shape == (3, 7, OUTPUT_DIM)
    assert jnp.allclose(out_odd, ref_odd, atol=1e-3, rtol=1e-3), (
        float(jnp.max(jnp.abs(out_odd - ref_odd))))

    print("KERNEL_OK")
</pallas_src>

<mosaic_0001>
module attributes {stable_mosaic.version = 11 : i64} {
  func.func @temporal_encoder_kernel(%arg0: i32, %arg1: memref<16x32xf32, #tpu.memory_space<vmem>>, %arg2: memref<32x128xf32, #tpu.memory_space<vmem>>, %arg3: memref<1x128xf32, #tpu.memory_space<vmem>>, %arg4: memref<128x256xf32, #tpu.memory_space<vmem>>, %arg5: memref<3x256xf32, #tpu.memory_space<vmem>>, %arg6: memref<16x256xf32, #tpu.memory_space<vmem>>) attributes {dimension_semantics = [#tpu.dimension_semantics<parallel>], iteration_bounds = array<i64: 1>, scalar_prefetch = 0 : i64, scratch_operands = 0 : i64, tpu.core_type = #tpu.core_type<tc>, window_params = [{transform_indices = @transform_0, window_bounds = array<i64: 16, 32>}, {pipeline_mode = #tpu.pipeline_mode<synchronous>, transform_indices = @transform_1, window_bounds = array<i64: 32, 128>}, {pipeline_mode = #tpu.pipeline_mode<synchronous>, transform_indices = @transform_2, window_bounds = array<i64: 1, 128>}, {pipeline_mode = #tpu.pipeline_mode<synchronous>, transform_indices = @transform_3, window_bounds = array<i64: 128, 256>}, {pipeline_mode = #tpu.pipeline_mode<synchronous>, transform_indices = @transform_4, window_bounds = array<i64: 3, 256>}, {transform_indices = @transform_5, window_bounds = array<i64: 16, 256>}]} {
    %c0 = arith.constant 0 : index
    %c0_0 = arith.constant 0 : index
    %0 = vector.load %arg1[%c0, %c0_0] : memref<16x32xf32, #tpu.memory_space<vmem>>, vector<16x32xf32>
    %c0_1 = arith.constant 0 : index
    %c0_2 = arith.constant 0 : index
    %1 = vector.load %arg2[%c0_1, %c0_2] : memref<32x128xf32, #tpu.memory_space<vmem>>, vector<32x128xf32>
    %cst = arith.constant dense<0.000000e+00> : vector<16x128xf32>
    %2 = tpu.matmul %0, %1, %cst {dimension_numbers = #tpu.dot_dimension_numbers<[1], [0], [0], [1], [0, 0, 1, 1], [], []>, precision = #tpu.contract_precision<fp32>} : vector<16x32xf32>, vector<32x128xf32>, vector<16x128xf32> -> vector<16x128xf32>
    %c0_3 = arith.constant 0 : index
    %c0_4 = arith.constant 0 : index
    %3 = vector.load %arg3[%c0_3, %c0_4] : memref<1x128xf32, #tpu.memory_space<vmem>>, vector<1x128xf32>
    %4 = vector.broadcast %3 : vector<1x128xf32> to vector<16x128xf32>
    %5 = arith.addf %2, %4 : vector<16x128xf32>
    %cst_5 = arith.constant 5.000000e-01 : f32
    %6 = vector.broadcast %cst_5 : f32 to vector<16x128xf32>
    %7 = arith.mulf %6, %5 : vector<16x128xf32>
    %cst_6 = arith.constant 0.707106769 : f32
    %8 = vector.broadcast %cst_6 : f32 to vector<16x128xf32>
    %9 = arith.mulf %5, %8 : vector<16x128xf32>
    %10 = math.erf %9 : vector<16x128xf32>
    %cst_7 = arith.constant 1.000000e+00 : f32
    %11 = vector.broadcast %cst_7 : f32 to vector<16x128xf32>
    %12 = arith.addf %11, %10 : vector<16x128xf32>
    %13 = arith.mulf %7, %12 : vector<16x128xf32>
    %cst_8 = arith.constant dense<0.000000e+00> : vector<16xf32>
    %14 = vector.multi_reduction <add>, %13, %cst_8 [1] : vector<16x128xf32> to vector<16xf32>
    %15 = vector.shape_cast %14 : vector<16xf32> to vector<16x1xf32>
    %cst_9 = arith.constant 1.280000e+02 : f32
    %16 = vector.broadcast %cst_9 : f32 to vector<16x1xf32>
    %17 = arith.divf %15, %16 : vector<16x1xf32>
    %18 = vector.broadcast %17 : vector<16x1xf32> to vector<16x128xf32>
    %19 = arith.subf %13, %18 : vector<16x128xf32>
    %20 = arith.mulf %19, %19 : vector<16x128xf32>
    %cst_10 = arith.constant dense<0.000000e+00> : vector<16xf32>
    %21 = vector.multi_reduction <add>, %20, %cst_10 [1] : vector<16x128xf32> to vector<16xf32>
    %22 = vector.shape_cast %21 : vector<16xf32> to vector<16x1xf32>
    %cst_11 = arith.constant 1.280000e+02 : f32
    %23 = vector.broadcast %cst_11 : f32 to vector<16x1xf32>
    %24 = arith.divf %22, %23 : vector<16x1xf32>
    %cst_12 = arith.constant 9.99999974E-6 : f32
    %25 = vector.broadcast %cst_12 : f32 to vector<16x1xf32>
    %26 = arith.addf %24, %25 : vector<16x1xf32>
    %27 = math.rsqrt %26 : vector<16x1xf32>
    %28 = vector.broadcast %27 : vector<16x1xf32> to vector<16x128xf32>
    %29 = arith.mulf %19, %28 : vector<16x128xf32>
    %c0_13 = arith.constant 0 : index
    %c0_14 = arith.constant 0 : index
    %30 = vector.load %arg4[%c0_13, %c0_14] : memref<128x256xf32, #tpu.memory_space<vmem>>, vector<128x256xf32>
    %cst_15 = arith.constant dense<0.000000e+00> : vector<16x256xf32>
    %31 = tpu.matmul %29, %30, %cst_15 {dimension_numbers = #tpu.dot_dimension_numbers<[1], [0], [0], [1], [0, 0, 1, 1], [], []>, precision = #tpu.contract_precision<fp32>} : vector<16x128xf32>, vector<128x256xf32>, vector<16x256xf32> -> vector<16x256xf32>
    %c0_16 = arith.constant 0 : index
    %c0_17 = arith.constant 0 : index
    %32 = vector.load %arg5[%c0_16, %c0_17] : memref<3x256xf32, #tpu.memory_space<vmem>>, vector<3x256xf32>
    %33 = vector.extract_strided_slice %32 {offsets = [0, 0], sizes = [1, 256], strides = [1, 1]} : vector<3x256xf32> to vector<1x256xf32>
    %34 = vector.broadcast %33 : vector<1x256xf32> to vector<16x256xf32>
    %35 = arith.addf %31, %34 : vector<16x256xf32>
    %cst_18 = arith.constant dense<0.000000e+00> : vector<16xf32>
    %36 = vector.multi_reduction <add>, %35, %cst_18 [1] : vector<16x256xf32> to vector<16xf32>
    %37 = vector.shape_cast %36 : vector<16xf32> to vector<16x1xf32>
    %cst_19 = arith.constant 2.560000e+02 : f32
    %38 = vector.broadcast %cst_19 : f32 to vector<16x1xf32>
    %39 = arith.divf %37, %38 : vector<16x1xf32>
    %40 = vector.broadcast %39 : vector<16x1xf32> to vector<16x256xf32>
    %41 = arith.subf %35, %40 : vector<16x256xf32>
    %42 = arith.mulf %41, %41 : vector<16x256xf32>
    %cst_20 = arith.constant dense<0.000000e+00> : vector<16xf32>
    %43 = vector.multi_reduction <add>, %42, %cst_20 [1] : vector<16x256xf32> to vector<16xf32>
    %44 = vector.shape_cast %43 : vector<16xf32> to vector<16x1xf32>
    %cst_21 = arith.constant 2.560000e+02 : f32
    %45 = vector.broadcast %cst_21 : f32 to vector<16x1xf32>
    %46 = arith.divf %44, %45 : vector<16x1xf32>
    %cst_22 = arith.constant 9.99999974E-6 : f32
    %47 = vector.broadcast %cst_22 : f32 to vector<16x1xf32>
    %48 = arith.addf %46, %47 : vector<16x1xf32>
    %49 = math.rsqrt %48 : vector<16x1xf32>
    %50 = vector.broadcast %49 : vector<16x1xf32> to vector<16x256xf32>
    %51 = arith.mulf %41, %50 : vector<16x256xf32>
    %52 = vector.extract_strided_slice %32 {offsets = [1, 0], sizes = [1, 256], strides = [1, 1]} : vector<3x256xf32> to vector<1x256xf32>
    %53 = vector.broadcast %52 : vector<1x256xf32> to vector<16x256xf32>
    %54 = arith.mulf %51, %53 : vector<16x256xf32>
    %55 = vector.extract_strided_slice %32 {offsets = [2, 0], sizes = [1, 256], strides = [1, 1]} : vector<3x256xf32> to vector<1x256xf32>
    %56 = vector.broadcast %55 : vector<1x256xf32> to vector<16x256xf32>
    %57 = arith.addf %54, %56 : vector<16x256xf32>
    %c0_23 = arith.constant 0 : index
    %c0_24 = arith.constant 0 : index
    %58 = vector.load %arg6[%c0_23, %c0_24] : memref<16x256xf32, #tpu.memory_space<vmem>>, vector<16x256xf32>
    tpu.vector_store %arg6[%c0_23, %c0_24], %57 {strides = array<i32>} : memref<16x256xf32, #tpu.memory_space<vmem>>, vector<16x256xf32>,
    return
  }
  func.func @transform_0(%arg0: i32) -> (i32, i32) {
    %c0_i32 = arith.constant 0 : i32
    %c0_i32_0 = arith.constant 0 : i32
    return %arg0, %c0_i32 : i32, i32
  }
  func.func @transform_1(%arg0: i32) -> (i32, i32) {
    %c0_i32 = arith.constant 0 : i32
    %c0_i32_0 = arith.constant 0 : i32
    %c0_i32_1 = arith.constant 0 : i32
    return %c0_i32, %c0_i32_0 : i32, i32
  }
  func.func @transform_2(%arg0: i32) -> (i32, i32) {
    %c0_i32 = arith.constant 0 : i32
    %c0_i32_0 = arith.constant 0 : i32
    %c0_i32_1 = arith.constant 0 : i32
    return %c0_i32, %c0_i32_0 : i32, i32
  }
  func.func @transform_3(%arg0: i32) -> (i32, i32) {
    %c0_i32 = arith.constant 0 : i32
    %c0_i32_0 = arith.constant 0 : i32
    %c0_i32_1 = arith.constant 0 : i32
    return %c0_i32, %c0_i32_0 : i32, i32
  }
  func.func @transform_4(%arg0: i32) -> (i32, i32) {
    %c0_i32 = arith.constant 0 : i32
    %c0_i32_0 = arith.constant 0 : i32
    %c0_i32_1 = arith.constant 0 : i32
    return %c0_i32, %c0_i32_0 : i32, i32
  }
  func.func @transform_5(%arg0: i32) -> (i32, i32) {
    %c0_i32 = arith.constant 0 : i32
    %c0_i32_0 = arith.constant 0 : i32
    return %arg0, %c0_i32 : i32, i32
  }
}

</mosaic_0001>

<llo_original>
// kernel: tpu_custom_call.1
$region0: #{tpu_custom_call.1}
  #allocation0 [shape = 'u32[]', space=smem, size = 0x4, offset = 0x4, fixed_abs, tag = 'smem constant byte address 0x4 - core index']
  #allocation1 [shape = 'u32[144,128]{1,0:T(1,128)}', space=vmem, size = 0x12000, scoped, tag = 'internal scratch']
  %s0 = inlined_call_operand.hbm [shape: f32[16,32], index: 0, kind: input, shape index: {}]
  %s1 = inlined_call_operand.hbm [shape: f32[32,128], index: 1, kind: input, shape index: {}]
  %s2 = inlined_call_operand.vmem [shape: f32[1,128], index: 2, kind: input, shape index: {}]
  %s3 = inlined_call_operand.hbm [shape: f32[128,256], index: 3, kind: input, shape index: {}]
  %s4 = inlined_call_operand.hbm [shape: f32[3,256], index: 4, kind: input, shape index: {}]
  %s5 = inlined_call_operand.hbm [shape: f32[16,256], index: 5, kind: output, shape index: {}]
  %s6 = sld [smem:[#allocation0]]
  $region46: #{tpu_custom_call.1} parent=0
    _
  %s8 = ssub.s32 1, %s6
  %s9 = scalar_select 0, %s8, %s6
  $region1: #{tpu_custom_call.1} parent=0
    #allocation2 [shape = 'u8[8192]{0}', space=vmem, size = 0x2000, scoped, tag = 'input window, operand 0, single buffered']
    #allocation3 [shape = 's32[1]{0}', space=sflag, size = 0x4, scoped, tag = 'scoped memory for tpu_custom_call.1']
    #allocation4 [shape = 's32[1]{0}', space=sflag, size = 0x4, scoped, tag = 'scoped memory for tpu_custom_call.1']
    #allocation5 [shape = 'u8[16384]{0}', space=vmem, size = 0x4000, scoped, tag = 'input window, operand 1, single buffered']
    #allocation6 [shape = 's32[1]{0}', space=sflag, size = 0x4, scoped, tag = 'scoped memory for tpu_custom_call.1']
    #allocation7 [shape = 'u8[131072]{0}', space=vmem, size = 0x20000, scoped, tag = 'input window, operand 3, single buffered']
    #allocation8 [shape = 'u8[4096]{0}', space=vmem, size = 0x1000, scoped, tag = 'input window, operand 4, single buffered']
    #allocation9 [shape = 's32[1]{0}', space=sflag, size = 0x4, scoped, tag = 'scoped memory for tpu_custom_call.1']
    #allocation10 [shape = 'u8[16384]{0}', space=vmem, size = 0x4000, scoped, tag = 'output window, operand 0, single buffered']
    %10 = vsyncpa [#allocation3], 0
    %11 = vsyncpa [#allocation6], 0
    %12 = vsyncpa [#allocation9], 0
    %13 = vsyncpa [#allocation4], 0
    // Predicated region
    $region2: #{tpu_custom_call.1} parent=1 // pred_check
      _
    $region3: #{tpu_custom_call.1} parent=1 // pred_check_branch
      %15 = sbr.rel (0) target = $region5
    $region4: #{tpu_custom_call.1} parent=1 // pred_region
      %s17 = ssub.s32 256, 256
      %18 = vsyncadd [#allocation3], %s17
      %s19 = sshll.u32 [#allocation2], 4
      %s20 = int_to_ptr.vmem [resolvable:$true] %s19
      %25 = dma.hbm_to_vmem [thread:$0]  %s0, 256, %s20, [#allocation3], 128, 128, 8
    $region5: #{tpu_custom_call.1} parent=1 // pred_fallthru
      _
    // Predicated region
    $region6: #{tpu_custom_call.1} parent=1 // pred_check
      _
    $region7: #{tpu_custom_call.1} parent=1 // pred_check_branch
      %27 = sbr.rel (0) target = $region9
    $region8: #{tpu_custom_call.1} parent=1 // pred_region
      %s29 = ssub.s32 512, 512
      %30 = vsyncadd [#allocation6], %s29
      %s31 = sshll.u32 [#allocation5], 4
      %s32 = int_to_ptr.vmem [resolvable:$true] %s31
      %37 = dma.hbm_to_vmem [thread:$0]  %s1, 512, %s32, [#allocation6], 128, 128, 8
    $region9: #{tpu_custom_call.1} parent=1 // pred_fallthru
      _
    // Predicated region
    $region10: #{tpu_custom_call.1} parent=1 // pred_check
      _
    $region11: #{tpu_custom_call.1} parent=1 // pred_check_branch
      %39 = sbr.rel (0) target = $region13
    $region12: #{tpu_custom_call.1} parent=1 // pred_region
      _
    $region13: #{tpu_custom_call.1} parent=1 // pred_fallthru
      _
    // Predicated region
    $region14: #{tpu_custom_call.1} parent=1 // pred_check
      _
    $region15: #{tpu_custom_call.1} parent=1 // pred_check_branch
      %41 = sbr.rel (0) target = $region17
    $region16: #{tpu_custom_call.1} parent=1 // pred_region
      %s43 = ssub.s32 4096, 4096
      %44 = vsyncadd [#allocation6], %s43
      %s45 = sshll.u32 [#allocation7], 4
      %s46 = int_to_ptr.vmem [resolvable:$true] %s45
      %51 = dma.hbm_to_vmem [thread:$0]  %s3, 4096, %s46, [#allocation6], 256, 256, 16
    $region17: #{tpu_custom_call.1} parent=1 // pred_fallthru
      _
    // Predicated region
    $region18: #{tpu_custom_call.1} parent=1 // pred_check
      _
    $region19: #{tpu_custom_call.1} parent=1 // pred_check_branch
      %53 = sbr.rel (0) target = $region21
    $region20: #{tpu_custom_call.1} parent=1 // pred_region
      %s55 = ssub.s32 128, 128
      %56 = vsyncadd [#allocation9], %s55
      %s58 = sshll.u32 [#allocation8], 4
      %s59 = int_to_ptr.vmem [resolvable:$true] %s58
      %61 = dma.hbm_to_vmem [thread:$0]  %s4, 128, %s59, [#allocation9]
    $region21: #{tpu_custom_call.1} parent=1 // pred_fallthru
      _
    // Predicated region
    $region22: #{tpu_custom_call.1} parent=1 // pred_check
      _
    $region23: #{tpu_custom_call.1} parent=1 // pred_check_branch
      %63 = sbr.rel (0) target = $region25
    $region24: #{tpu_custom_call.1} parent=1 // pred_region
      %64 = dma.done [#allocation3], 256
    $region25: #{tpu_custom_call.1} parent=1 // pred_fallthru
      _
    // Predicated region
    $region26: #{tpu_custom_call.1} parent=1 // pred_check
      _
    $region27: #{tpu_custom_call.1} parent=1 // pred_check_branch
      %66 = sbr.rel (0) target = $region29
    $region28: #{tpu_custom_call.1} parent=1 // pred_region
      %67 = dma.done [#allocation6], 512
    $region29: #{tpu_custom_call.1} parent=1 // pred_fallthru
      _
    // Predicated region
    $region30: #{tpu_custom_call.1} parent=1 // pred_check
      _
    $region31: #{tpu_custom_call.1} parent=1 // pred_check_branch
      %69 = sbr.rel (0) target = $region33
    $region32: #{tpu_custom_call.1} parent=1 // pred_region
      %70 = dma.done [#allocation6], 4096
    $region33: #{tpu_custom_call.1} parent=1 // pred_fallthru
      _
    // Predicated region
    $region34: #{tpu_custom_call.1} parent=1 // pred_check
      _
    $region35: #{tpu_custom_call.1} parent=1 // pred_check_branch
      %72 = sbr.rel (0) target = $region37
    $region36: #{tpu_custom_call.1} parent=1 // pred_region
      %73 = dma.done [#allocation9], 128
    $region37: #{tpu_custom_call.1} parent=1 // pred_fallthru
      _
    %v74 = vld [vmem:[#allocation2] sm:$0xff]
    %v75 = vld [vmem:[#allocation2 + $0x8] sm:$0xff]
    %v76 = vld [vmem:[#allocation5] sm:$0xff]
    %v77 = vld [vmem:[#allocation5 + $0x8] sm:$0xff]
    %v78 = vld [vmem:[#allocation5 + $0x10] sm:$0xff]
    %v79 = vld [vmem:[#allocation5 + $0x18] sm:$0xff]
    %v80 = vld [vmem:[%s2] sm:$0x1]
    %v82 = vlaneseq
    %v83 = vshrl.u32 %v82, 7
    %v84 = vsub.s32 0, %v83
    %v85 = vrot.slane %v80, %v84
    %vm87 = vcmask 261120
    %v89 = vsel %vm87, %v74, 0
    %v92 = vsel %vm87, %v75, 0
    %94 = vmatprep.subr.mxu0 0.0
    %95 = vmatpush1.msra.mxu0 0.0
    %96 = vmatprep.subr.mxu0 0.0
    %97 = vmatpush1.msra.mxu0 0.0
    %98 = vmatprep.subr.mxu0 0.0
    %99 = vmatpush1.msra.mxu0 0.0
    %100 = vmatprep.subr.mxu0 0.0
    %101 = vmatpush1.msra.mxu0 0.0
    %102 = vmatprep.subr.mxu0 0.0
    %103 = vmatpush1.msra.mxu0 0.0
    %104 = vmatprep.subr.mxu0 0.0
    %105 = vmatpush1.msra.mxu0 0.0
    %106 = vmatprep.subr.mxu0 0.0
    %107 = vmatpush1.msra.mxu0 0.0
    %108 = vmatprep.subr.mxu0 0.0
    %109 = vmatpush1.msra.mxu0 0.0
    %110 = vmatprep.subr.mxu0 0.0
    %111 = vmatpush1.msra.mxu0 0.0
    %112 = vmatprep.subr.mxu0 0.0
    %113 = vmatpush1.msra.mxu0 0.0
    %114 = vmatprep.subr.mxu0 0.0
    %115 = vmatpush1.msra.mxu0 0.0
    %116 = vmatprep.subr.mxu0 0.0
    %117 = vmatpush1.msra.mxu0 0.0
    %118 = vmatprep.subr.mxu0 0.0
    %v119 = vand.u32 %v79, 4294901760
    %120 = vmatpush1.msra.mxu0 %v119
    %121 = vmatprep.subr.mxu0 0.0
    %v122 = vand.u32 %v78, 4294901760
    %123 = vmatpush1.msra.mxu0 %v122
    %124 = vmatprep.subr.mxu0 0.0
    %v125 = vand.u32 %v77, 4294901760
    %126 = vmatpush1.msra.mxu0 %v125
    %127 = vmatprep.subr.mxu0 0.0
    %v128 = vand.u32 %v76, 4294901760
    %129 = vmatpush1.msra.mxu0 %v128
    %130 = vmatprep.subr.mxu0 0.0
    %131 = vmatpush2.msra.mxu0 0.0
    %132 = vmatprep.subr.mxu0 0.0
    %133 = vmatpush2.msra.mxu0 0.0
    %134 = vmatprep.subr.mxu0 0.0
    %135 = vmatpush2.msra.mxu0 0.0
    %136 = vmatprep.subr.mxu0 0.0
    %137 = vmatpush2.msra.mxu0 0.0
    %138 = vmatprep.subr.mxu0 0.0
    %139 = vmatpush2.msra.mxu0 0.0
    %140 = vmatprep.subr.mxu0 0.0
    %141 = vmatpush2.msra.mxu0 0.0
    %142 = vmatprep.subr.mxu0 0.0
    %143 = vmatpush2.msra.mxu0 0.0
    %144 = vmatprep.subr.mxu0 0.0
    %145 = vmatpush2.msra.mxu0 0.0
    %146 = vmatprep.subr.mxu0 0.0
    %147 = vmatpush2.msra.mxu0 0.0
    %148 = vmatprep.subr.mxu0 0.0
    %149 = vmatpush2.msra.mxu0 0.0
    %150 = vmatprep.subr.mxu0 0.0
    %151 = vmatpush2.msra.mxu0 0.0
    %152 = vmatprep.subr.mxu0 0.0
    %153 = vmatpush2.msra.mxu0 0.0
    %154 = vmatprep.subr.mxu0 0.0
    %155 = vmatpush2.msra.mxu0 0.0
    %156 = vmatprep.subr.mxu0 0.0
    %157 = vmatpush2.msra.mxu0 0.0
    %158 = vmatprep.subr.mxu0 0.0
    %159 = vmatpush2.msra.mxu0 0.0
    %160 = vmatprep.subr.mxu0 0.0
    %161 = vmatpush2.msra.mxu0 0.0
    %162 = vmatprep.mubr.f32.mxu0 0.0
    %v163 = vand.u32 %v89, 4294901760
    %v164 = vsub.f32 %v89, %v163
    %v165 = vand.u32 %v164, 4294901760
    %v166 = vsub.f32 %v164, %v165
    %v167 = vand.u32 %v166, 4294901760
    %168 = vmatmul.mubr.f32.gmra.mxu0 %v167
    %v169 = vpop.f32.mrf.mxu0
    %v170 = vadd.f32 %v85, %v169
    %v171 = vpop.f32.mrf.mxu0
    %172 = vmatprep.mubr.f32.mxu0 0.0
    %v173 = vand.u32 %v92, 4294901760
    %v174 = vsub.f32 %v92, %v173
    %v175 = vand.u32 %v174, 4294901760
    %v176 = vsub.f32 %v174, %v175
    %v177 = vand.u32 %v176, 4294901760
    %178 = vmatmul.mubr.f32.gmra.mxu0 %v177
    %v179 = vpop.f32.mrf.mxu0
    %v180 = vadd.f32 %v85, %v179
    %v181 = vpop.f32.mrf.mxu0
    %182 = vdwg.mxu0
    %183 = vmatprep.subr.mxu0 0.0
    %184 = vmatpush1.msra.mxu0 0.0
    %185 = vmatprep.subr.mxu0 0.0
    %186 = vmatpush1.msra.mxu0 0.0
    %187 = vmatprep.subr.mxu0 0.0
    %188 = vmatpush1.msra.mxu0 0.0
    %189 = vmatprep.subr.mxu0 0.0
    %190 = vmatpush1.msra.mxu0 0.0
    %191 = vmatprep.subr.mxu0 0.0
    %192 = vmatpush1.msra.mxu0 0.0
    %193 = vmatprep.subr.mxu0 0.0
    %194 = vmatpush1.msra.mxu0 0.0
    %195 = vmatprep.subr.mxu0 0.0
    %196 = vmatpush1.msra.mxu0 0.0
    %197 = vmatprep.subr.mxu0 0.0
    %198 = vmatpush1.msra.mxu0 0.0
    %199 = vmatprep.subr.mxu0 0.0
    %200 = vmatpush1.msra.mxu0 0.0
    %201 = vmatprep.subr.mxu0 0.0
    %202 = vmatpush1.msra.mxu0 0.0
    %203 = vmatprep.subr.mxu0 0.0
    %204 = vmatpush1.msra.mxu0 0.0
    %205 = vmatprep.subr.mxu0 0.0
    %206 = vmatpush1.msra.mxu0 0.0
    %207 = vmatprep.subr.mxu0 0.0
    %v208 = vand.u32 %v79, 4294901760
    %v209 = vsub.f32 %v79, %v208
    %v210 = vand.u32 %v209, 4294901760
    %v211 = vsub.f32 %v209, %v210
    %v212 = vand.u32 %v211, 4294901760
    %213 = vmatpush1.msra.mxu0 %v212
    %214 = vmatprep.subr.mxu0 0.0
    %v215 = vand.u32 %v78, 4294901760
    %v216 = vsub.f32 %v78, %v215
    %v217 = vand.u32 %v216, 4294901760
    %v218 = vsub.f32 %v216, %v217
    %v219 = vand.u32 %v218, 4294901760
    %220 = vmatpush1.msra.mxu0 %v219
    %221 = vmatprep.subr.mxu0 0.0
    %v222 = vand.u32 %v77, 4294901760
    %v223 = vsub.f32 %v77, %v222
    %v224 = vand.u32 %v223, 4294901760
    %v225 = vsub.f32 %v223, %v224
    %v226 = vand.u32 %v225, 4294901760
    %227 = vmatpush1.msra.mxu0 %v226
    %228 = vmatprep.subr.mxu0 0.0
    %v229 = vand.u32 %v76, 4294901760
    %v230 = vsub.f32 %v76, %v229
    %v231 = vand.u32 %v230, 4294901760
    %v232 = vsub.f32 %v230, %v231
    %v233 = vand.u32 %v232, 4294901760
    %234 = vmatpush1.msra.mxu0 %v233
    %235 = vmatprep.subr.mxu0 0.0
    %236 = vmatpush2.msra.mxu0 0.0
    %237 = vmatprep.subr.mxu0 0.0
    %238 = vmatpush2.msra.mxu0 0.0
    %239 = vmatprep.subr.mxu0 0.0
    %240 = vmatpush2.msra.mxu0 0.0
    %241 = vmatprep.subr.mxu0 0.0
    %242 = vmatpush2.msra.mxu0 0.0
    %243 = vmatprep.subr.mxu0 0.0
    %244 = vmatpush2.msra.mxu0 0.0
    %245 = vmatprep.subr.mxu0 0.0
    %246 = vmatpush2.msra.mxu0 0.0
    %247 = vmatprep.subr.mxu0 0.0
    %248 = vmatpush2.msra.mxu0 0.0
    %249 = vmatprep.subr.mxu0 0.0
    %250 = vmatpush2.msra.mxu0 0.0
    %251 = vmatprep.subr.mxu0 0.0
    %252 = vmatpush2.msra.mxu0 0.0
    %253 = vmatprep.subr.mxu0 0.0
    %254 = vmatpush2.msra.mxu0 0.0
    %255 = vmatprep.subr.mxu0 0.0
    %256 = vmatpush2.msra.mxu0 0.0
    %257 = vmatprep.subr.mxu0 0.0
    %258 = vmatpush2.msra.mxu0 0.0
    %259 = vmatprep.subr.mxu0 0.0
    %260 = vmatpush2.msra.mxu0 0.0
    %261 = vmatprep.subr.mxu0 0.0
    %262 = vmatpush2.msra.mxu0 0.0
    %263 = vmatprep.subr.mxu0 0.0
    %264 = vmatpush2.msra.mxu0 0.0
    %265 = vmatprep.subr.mxu0 0.0
    %266 = vmatpush2.msra.mxu0 0.0
    %267 = vmatprep.mubr.f32.mxu0 0.0
    %v268 = vand.u32 %v89, 4294901760
    %269 = vmatmul.mubr.f32.gmra.mxu0 %v268
    %v270 = vpop.f32.mrf.mxu0
    %v271 = vadd.f32 %v170, %v270
    %v272 = vpop.f32.mrf.mxu0
    %273 = vmatprep.mubr.f32.mxu0 0.0
    %v274 = vand.u32 %v92, 4294901760
    %275 = vmatmul.mubr.f32.gmra.mxu0 %v274
    %v276 = vpop.f32.mrf.mxu0
    %v277 = vadd.f32 %v180, %v276
    %v278 = vpop.f32.mrf.mxu0
    %279 = vdwg.mxu0
    %280 = vmatprep.subr.mxu0 0.0
    %281 = vmatpush1.msra.mxu0 0.0
    %282 = vmatprep.subr.mxu0 0.0
    %283 = vmatpush1.msra.mxu0 0.0
    %284 = vmatprep.subr.mxu0 0.0
    %285 = vmatpush1.msra.mxu0 0.0
    %286 = vmatprep.subr.mxu0 0.0
    %287 = vmatpush1.msra.mxu0 0.0
    %288 = vmatprep.subr.mxu0 0.0
    %289 = vmatpush1.msra.mxu0 0.0
    %290 = vmatprep.subr.mxu0 0.0
    %291 = vmatpush1.msra.mxu0 0.0
    %292 = vmatprep.subr.mxu0 0.0
    %293 = vmatpush1.msra.mxu0 0.0
    %294 = vmatprep.subr.mxu0 0.0
    %295 = vmatpush1.msra.mxu0 0.0
    %296 = vmatprep.subr.mxu0 0.0
    %297 = vmatpush1.msra.mxu0 0.0
    %298 = vmatprep.subr.mxu0 0.0
    %299 = vmatpush1.msra.mxu0 0.0
    %300 = vmatprep.subr.mxu0 0.0
    %301 = vmatpush1.msra.mxu0 0.0
    %302 = vmatprep.subr.mxu0 0.0
    %303 = vmatpush1.msra.mxu0 0.0
    %304 = vmatprep.subr.mxu0 0.0
    %v305 = vand.u32 %v79, 4294901760
    %v306 = vsub.f32 %v79, %v305
    %307 = vmatpush1.msra.mxu0 %v306
    %308 = vmatprep.subr.mxu0 0.0
    %v309 = vand.u32 %v78, 4294901760
    %v310 = vsub.f32 %v78, %v309
    %311 = vmatpush1.msra.mxu0 %v310
    %312 = vmatprep.subr.mxu0 0.0
    %v313 = vand.u32 %v77, 4294901760
    %v314 = vsub.f32 %v77, %v313
    %315 = vmatpush1.msra.mxu0 %v314
    %316 = vmatprep.subr.mxu0 0.0
    %v317 = vand.u32 %v76, 4294901760
    %v318 = vsub.f32 %v76, %v317
    %319 = vmatpush1.msra.mxu0 %v318
    %320 = vmatprep.subr.mxu0 0.0
    %321 = vmatpush2.msra.mxu0 0.0
    %322 = vmatprep.subr.mxu0 0.0
    %323 = vmatpush2.msra.mxu0 0.0
    %324 = vmatprep.subr.mxu0 0.0
    %325 = vmatpush2.msra.mxu0 0.0
    %326 = vmatprep.subr.mxu0 0.0
    %327 = vmatpush2.msra.mxu0 0.0
    %328 = vmatprep.subr.mxu0 0.0
    %329 = vmatpush2.msra.mxu0 0.0
    %330 = vmatprep.subr.mxu0 0.0
    %331 = vmatpush2.msra.mxu0 0.0
    %332 = vmatprep.subr.mxu0 0.0
    %333 = vmatpush2.msra.mxu0 0.0
    %334 = vmatprep.subr.mxu0 0.0
    %335 = vmatpush2.msra.mxu0 0.0
    %336 = vmatprep.subr.mxu0 0.0
    %337 = vmatpush2.msra.mxu0 0.0
    %338 = vmatprep.subr.mxu0 0.0
    %339 = vmatpush2.msra.mxu0 0.0
    %340 = vmatprep.subr.mxu0 0.0
    %341 = vmatpush2.msra.mxu0 0.0
    %342 = vmatprep.subr.mxu0 0.0
    %343 = vmatpush2.msra.mxu0 0.0
    %344 = vmatprep.subr.mxu0 0.0
    %345 = vmatpush2.msra.mxu0 0.0
    %346 = vmatprep.subr.mxu0 0.0
    %347 = vmatpush2.msra.mxu0 0.0
    %348 = vmatprep.subr.mxu0 0.0
    %349 = vmatpush2.msra.mxu0 0.0
    %350 = vmatprep.subr.mxu0 0.0
    %351 = vmatpush2.msra.mxu0 0.0
    %352 = vmatprep.mubr.f32.mxu0 0.0
    %v353 = vand.u32 %v89, 4294901760
    %v354 = vsub.f32 %v89, %v353
    %355 = vmatmul.mubr.f32.gmra.mxu0 %v354
    %v356 = vpop.f32.mrf.mxu0
    %v357 = vadd.f32 %v271, %v356
    %v358 = vpop.f32.mrf.mxu0
    %359 = vmatprep.mubr.f32.mxu0 0.0
    %v360 = vand.u32 %v92, 4294901760
    %v361 = vsub.f32 %v92, %v360
    %362 = vmatmul.mubr.f32.gmra.mxu0 %v361
    %v363 = vpop.f32.mrf.mxu0
    %v364 = vadd.f32 %v277, %v363
    %v365 = vpop.f32.mrf.mxu0
    %366 = vdwg.mxu0
    %367 = vmatprep.subr.mxu0 0.0
    %368 = vmatpush1.msra.mxu0 0.0
    %369 = vmatprep.subr.mxu0 0.0
    %370 = vmatpush1.msra.mxu0 0.0
    %371 = vmatprep.subr.mxu0 0.0
    %372 = vmatpush1.msra.mxu0 0.0
    %373 = vmatprep.subr.mxu0 0.0
    %374 = vmatpush1.msra.mxu0 0.0
    %375 = vmatprep.subr.mxu0 0.0
    %376 = vmatpush1.msra.mxu0 0.0
    %377 = vmatprep.subr.mxu0 0.0
    %378 = vmatpush1.msra.mxu0 0.0
    %379 = vmatprep.subr.mxu0 0.0
    %380 = vmatpush1.msra.mxu0 0.0
    %381 = vmatprep.subr.mxu0 0.0
    %382 = vmatpush1.msra.mxu0 0.0
    %383 = vmatprep.subr.mxu0 0.0
    %384 = vmatpush1.msra.mxu0 0.0
    %385 = vmatprep.subr.mxu0 0.0
    %386 = vmatpush1.msra.mxu0 0.0
    %387 = vmatprep.subr.mxu0 0.0
    %388 = vmatpush1.msra.mxu0 0.0
    %389 = vmatprep.subr.mxu0 0.0
    %390 = vmatpush1.msra.mxu0 0.0
    %391 = vmatprep.subr.mxu0 0.0
    %v392 = vand.u32 %v79, 4294901760
    %393 = vmatpush1.msra.mxu0 %v392
    %394 = vmatprep.subr.mxu0 0.0
    %v395 = vand.u32 %v78, 4294901760
    %396 = vmatpush1.msra.mxu0 %v395
    %397 = vmatprep.subr.mxu0 0.0
    %v398 = vand.u32 %v77, 4294901760
    %399 = vmatpush1.msra.mxu0 %v398
    %400 = vmatprep.subr.mxu0 0.0
    %v401 = vand.u32 %v76, 4294901760
    %402 = vmatpush1.msra.mxu0 %v401
    %403 = vmatprep.subr.mxu0 0.0
    %404 = vmatpush2.msra.mxu0 0.0
    %405 = vmatprep.subr.mxu0 0.0
    %406 = vmatpush2.msra.mxu0 0.0
    %407 = vmatprep.subr.mxu0 0.0
    %408 = vmatpush2.msra.mxu0 0.0
    %409 = vmatprep.subr.mxu0 0.0
    %410 = vmatpush2.msra.mxu0 0.0
    %411 = vmatprep.subr.mxu0 0.0
    %412 = vmatpush2.msra.mxu0 0.0
    %413 = vmatprep.subr.mxu0 0.0
    %414 = vmatpush2.msra.mxu0 0.0
    %415 = vmatprep.subr.mxu0 0.0
    %416 = vmatpush2.msra.mxu0 0.0
    %417 = vmatprep.subr.mxu0 0.0
    %418 = vmatpush2.msra.mxu0 0.0
    %419 = vmatprep.subr.mxu0 0.0
    %420 = vmatpush2.msra.mxu0 0.0
    %421 = vmatprep.subr.mxu0 0.0
    %422 = vmatpush2.msra.mxu0 0.0
    %423 = vmatprep.subr.mxu0 0.0
    %424 = vmatpush2.msra.mxu0 0.0
    %425 = vmatprep.subr.mxu0 0.0
    %426 = vmatpush2.msra.mxu0 0.0
    %427 = vmatprep.subr.mxu0 0.0
    %428 = vmatpush2.msra.mxu0 0.0
    %429 = vmatprep.subr.mxu0 0.0
    %430 = vmatpush2.msra.mxu0 0.0
    %431 = vmatprep.subr.mxu0 0.0
    %432 = vmatpush2.msra.mxu0 0.0
    %433 = vmatprep.subr.mxu0 0.0
    %434 = vmatpush2.msra.mxu0 0.0
    %435 = vmatprep.mubr.f32.mxu0 0.0
    %v436 = vand.u32 %v89, 4294901760
    %v437 = vsub.f32 %v89, %v436
    %v438 = vand.u32 %v437, 4294901760
    %439 = vmatmul.mubr.f32.gmra.mxu0 %v438
    %v440 = vpop.f32.mrf.mxu0
    %v441 = vadd.f32 %v357, %v440
    %v442 = vpop.f32.mrf.mxu0
    %443 = vmatprep.mubr.f32.mxu0 0.0
    %v444 = vand.u32 %v92, 4294901760
    %v445 = vsub.f32 %v92, %v444
    %v446 = vand.u32 %v445, 4294901760
    %447 = vmatmul.mubr.f32.gmra.mxu0 %v446
    %v448 = vpop.f32.mrf.mxu0
    %v449 = vadd.f32 %v364, %v448
    %v450 = vpop.f32.mrf.mxu0
    %451 = vdwg.mxu0
    %452 = vmatprep.subr.mxu0 0.0
    %453 = vmatpush1.msra.mxu0 0.0
    %454 = vmatprep.subr.mxu0 0.0
    %455 = vmatpush1.msra.mxu0 0.0
    %456 = vmatprep.subr.mxu0 0.0
    %457 = vmatpush1.msra.mxu0 0.0
    %458 = vmatprep.subr.mxu0 0.0
    %459 = vmatpush1.msra.mxu0 0.0
    %460 = vmatprep.subr.mxu0 0.0
    %461 = vmatpush1.msra.mxu0 0.0
    %462 = vmatprep.subr.mxu0 0.0
    %463 = vmatpush1.msra.mxu0 0.0
    %464 = vmatprep.subr.mxu0 0.0
    %465 = vmatpush1.msra.mxu0 0.0
    %466 = vmatprep.subr.mxu0 0.0
    %467 = vmatpush1.msra.mxu0 0.0
    %468 = vmatprep.subr.mxu0 0.0
    %469 = vmatpush1.msra.mxu0 0.0
    %470 = vmatprep.subr.mxu0 0.0
    %471 = vmatpush1.msra.mxu0 0.0
    %472 = vmatprep.subr.mxu0 0.0
    %473 = vmatpush1.msra.mxu0 0.0
    %474 = vmatprep.subr.mxu0 0.0
    %475 = vmatpush1.msra.mxu0 0.0
    %476 = vmatprep.subr.mxu0 0.0
    %v477 = vand.u32 %v79, 4294901760
    %v478 = vsub.f32 %v79, %v477
    %v479 = vand.u32 %v478, 4294901760
    %480 = vmatpush1.msra.mxu0 %v479
    %481 = vmatprep.subr.mxu0 0.0
    %v482 = vand.u32 %v78, 4294901760
    %v483 = vsub.f32 %v78, %v482
    %v484 = vand.u32 %v483, 4294901760
    %485 = vmatpush1.msra.mxu0 %v484
    %486 = vmatprep.subr.mxu0 0.0
    %v487 = vand.u32 %v77, 4294901760
    %v488 = vsub.f32 %v77, %v487
    %v489 = vand.u32 %v488, 4294901760
    %490 = vmatpush1.msra.mxu0 %v489
    %491 = vmatprep.subr.mxu0 0.0
    %v492 = vand.u32 %v76, 4294901760
    %v493 = vsub.f32 %v76, %v492
    %v494 = vand.u32 %v493, 4294901760
    %495 = vmatpush1.msra.mxu0 %v494
    %496 = vmatprep.subr.mxu0 0.0
    %497 = vmatpush2.msra.mxu0 0.0
    %498 = vmatprep.subr.mxu0 0.0
    %499 = vmatpush2.msra.mxu0 0.0
    %500 = vmatprep.subr.mxu0 0.0
    %501 = vmatpush2.msra.mxu0 0.0
    %502 = vmatprep.subr.mxu0 0.0
    %503 = vmatpush2.msra.mxu0 0.0
    %504 = vmatprep.subr.mxu0 0.0
    %505 = vmatpush2.msra.mxu0 0.0
    %506 = vmatprep.subr.mxu0 0.0
    %507 = vmatpush2.msra.mxu0 0.0
    %508 = vmatprep.subr.mxu0 0.0
    %509 = vmatpush2.msra.mxu0 0.0
    %510 = vmatprep.subr.mxu0 0.0
    %511 = vmatpush2.msra.mxu0 0.0
    %512 = vmatprep.subr.mxu0 0.0
    %513 = vmatpush2.msra.mxu0 0.0
    %514 = vmatprep.subr.mxu0 0.0
    %515 = vmatpush2.msra.mxu0 0.0
    %516 = vmatprep.subr.mxu0 0.0
    %517 = vmatpush2.msra.mxu0 0.0
    %518 = vmatprep.subr.mxu0 0.0
    %519 = vmatpush2.msra.mxu0 0.0
    %520 = vmatprep.subr.mxu0 0.0
    %521 = vmatpush2.msra.mxu0 0.0
    %522 = vmatprep.subr.mxu0 0.0
    %523 = vmatpush2.msra.mxu0 0.0
    %524 = vmatprep.subr.mxu0 0.0
    %525 = vmatpush2.msra.mxu0 0.0
    %526 = vmatprep.subr.mxu0 0.0
    %527 = vmatpush2.msra.mxu0 0.0
    %528 = vmatprep.mubr.f32.mxu0 0.0
    %v529 = vand.u32 %v89, 4294901760
    %530 = vmatmul.mubr.f32.gmra.mxu0 %v529
    %v531 = vpop.f32.mrf.mxu0
    %v532 = vadd.f32 %v441, %v531
    %v533 = vpop.f32.mrf.mxu0
    %534 = vmatprep.mubr.f32.mxu0 0.0
    %v535 = vand.u32 %v92, 4294901760
    %536 = vmatmul.mubr.f32.gmra.mxu0 %v535
    %v537 = vpop.f32.mrf.mxu0
    %v538 = vadd.f32 %v449, %v537
    %v539 = vpop.f32.mrf.mxu0
    %540 = vdwg.mxu0
    %541 = vmatprep.subr.mxu0 0.0
    %542 = vmatpush1.msra.mxu0 0.0
    %543 = vmatprep.subr.mxu0 0.0
    %544 = vmatpush1.msra.mxu0 0.0
    %545 = vmatprep.subr.mxu0 0.0
    %546 = vmatpush1.msra.mxu0 0.0
    %547 = vmatprep.subr.mxu0 0.0
    %548 = vmatpush1.msra.mxu0 0.0
    %549 = vmatprep.subr.mxu0 0.0
    %550 = vmatpush1.msra.mxu0 0.0
    %551 = vmatprep.subr.mxu0 0.0
    %552 = vmatpush1.msra.mxu0 0.0
    %553 = vmatprep.subr.mxu0 0.0
    %554 = vmatpush1.msra.mxu0 0.0
    %555 = vmatprep.subr.mxu0 0.0
    %556 = vmatpush1.msra.mxu0 0.0
    %557 = vmatprep.subr.mxu0 0.0
    %558 = vmatpush1.msra.mxu0 0.0
    %559 = vmatprep.subr.mxu0 0.0
    %560 = vmatpush1.msra.mxu0 0.0
    %561 = vmatprep.subr.mxu0 0.0
    %562 = vmatpush1.msra.mxu0 0.0
    %563 = vmatprep.subr.mxu0 0.0
    %564 = vmatpush1.msra.mxu0 0.0
    %565 = vmatprep.subr.mxu0 0.0
    %v566 = vand.u32 %v79, 4294901760
    %567 = vmatpush1.msra.mxu0 %v566
    %568 = vmatprep.subr.mxu0 0.0
    %v569 = vand.u32 %v78, 4294901760
    %570 = vmatpush1.msra.mxu0 %v569
    %571 = vmatprep.subr.mxu0 0.0
    %v572 = vand.u32 %v77, 4294901760
    %573 = vmatpush1.msra.mxu0 %v572
    %574 = vmatprep.subr.mxu0 0.0
    %v575 = vand.u32 %v76, 4294901760
    %576 = vmatpush1.msra.mxu0 %v575
    %577 = vmatprep.subr.mxu0 0.0
    %578 = vmatpush2.msra.mxu0 0.0
    %579 = vmatprep.subr.mxu0 0.0
    %580 = vmatpush2.msra.mxu0 0.0
    %581 = vmatprep.subr.mxu0 0.0
    %582 = vmatpush2.msra.mxu0 0.0
    %583 = vmatprep.subr.mxu0 0.0
    %584 = vmatpush2.msra.mxu0 0.0
    %585 = vmatprep.subr.mxu0 0.0
    %586 = vmatpush2.msra.mxu0 0.0
    %587 = vmatprep.subr.mxu0 0.0
    %588 = vmatpush2.msra.mxu0 0.0
    %589 = vmatprep.subr.mxu0 0.0
    %590 = vmatpush2.msra.mxu0 0.0
    %591 = vmatprep.subr.mxu0 0.0
    %592 = vmatpush2.msra.mxu0 0.0
    %593 = vmatprep.subr.mxu0 0.0
    %594 = vmatpush2.msra.mxu0 0.0
    %595 = vmatprep.subr.mxu0 0.0
    %596 = vmatpush2.msra.mxu0 0.0
    %597 = vmatprep.subr.mxu0 0.0
    %598 = vmatpush2.msra.mxu0 0.0
    %599 = vmatprep.subr.mxu0 0.0
    %600 = vmatpush2.msra.mxu0 0.0
    %601 = vmatprep.subr.mxu0 0.0
    %602 = vmatpush2.msra.mxu0 0.0
    %603 = vmatprep.subr.mxu0 0.0
    %604 = vmatpush2.msra.mxu0 0.0
    %605 = vmatprep.subr.mxu0 0.0
    %606 = vmatpush2.msra.mxu0 0.0
    %607 = vmatprep.subr.mxu0 0.0
    %608 = vmatpush2.msra.mxu0 0.0
    %609 = vmatprep.mubr.f32.mxu0 0.0
    %v610 = vand.u32 %v89, 4294901760
    %611 = vmatmul.mubr.f32.gmra.mxu0 %v610
    %v612 = vpop.f32.mrf.mxu0
    %v613 = vadd.f32 %v532, %v612
    %v614 = vpop.f32.mrf.mxu0
    %615 = vmatprep.mubr.f32.mxu0 0.0
    %v616 = vand.u32 %v92, 4294901760
    %617 = vmatmul.mubr.f32.gmra.mxu0 %v616
    %v618 = vpop.f32.mrf.mxu0
    %v619 = vadd.f32 %v538, %v618
    %v620 = vpop.f32.mrf.mxu0
    %621 = vdwg.mxu0
    %v622 = vmul.f32 %v613, 0.5
    %v623 = vmul.f32 %v619, 0.5
    %v624 = vmul.f32 %v613, 0.70710677
    %v625 = vmul.f32 %v619, 0.70710677
    %v626 = verf.f32.pop %v624
    %v627 = verf.f32.pop %v625
    %v628 = vadd.f32 %v626, 1.0
    %v629 = vadd.f32 %v627, 1.0
    %v630 = vmul.f32 %v622, %v628
    %v631 = vmul.f32 %v623, %v629
    %632 = vadd.xlane.f32.xlu0 %v630
    %v633 = vpop.xlane.xlu0 %632
    %634 = vadd.xlane.f32.xlu0 %v631
    %v635 = vpop.xlane.xlu0 %634
    %v636 = vrcp.pop 128.0
    %v637 = vmul.f32 %v633, %v636
    %v638 = vmul.f32 %v635, %v636
    %v639 = vsub.f32 %v630, %v637
    %v640 = vsub.f32 %v631, %v638
    %v641 = vmul.f32 %v639, %v639
    %v642 = vmul.f32 %v640, %v640
    %643 = vadd.xlane.f32.xlu0 %v641
    %v644 = vpop.xlane.xlu0 %643
    %645 = vadd.xlane.f32.xlu0 %v642
    %v646 = vpop.xlane.xlu0 %645
    %v647 = vmul.f32 %v644, %v636
    %v648 = vmul.f32 %v646, %v636
    %v649 = vadd.f32 %v647, 1e-05
    %v650 = vadd.f32 %v648, 1e-05
    %v651 = vrsqrt.pop %v649
    %v652 = vrsqrt.pop %v650
    %v653 = vmul.f32 %v639, %v651
    %v654 = vmul.f32 %v640, %v652
    %v655 = vld [vmem:[#allocation7] sm:$0xff]
    %v656 = vld [vmem:[#allocation7 + $0x8] sm:$0xff]
    %v657 = vld [vmem:[#allocation7 + $0x10] sm:$0xff]
    %v658 = vld [vmem:[#allocation7 + $0x18] sm:$0xff]
    %v659 = vld [vmem:[#allocation7 + $0x20] sm:$0xff]
    %v660 = vld [vmem:[#allocation7 + $0x28] sm:$0xff]
    %v661 = vld [vmem:[#allocation7 + $0x30] sm:$0xff]
    %v662 = vld [vmem:[#allocation7 + $0x38] sm:$0xff]
    %v663 = vld [vmem:[#allocation7 + $0x40] sm:$0xff]
    %v664 = vld [vmem:[#allocation7 + $0x48] sm:$0xff]
    %v665 = vld [vmem:[#allocation7 + $0x50] sm:$0xff]
    %v666 = vld [vmem:[#allocation7 + $0x58] sm:$0xff]
    %v667 = vld [vmem:[#allocation7 + $0x60] sm:$0xff]
    %v668 = vld [vmem:[#allocation7 + $0x68] sm:$0xff]
    %v669 = vld [vmem:[#allocation7 + $0x70] sm:$0xff]
    %v670 = vld [vmem:[#allocation7 + $0x78] sm:$0xff]
    %v671 = vld [vmem:[#allocation7 + $0x80] sm:$0xff]
    %v672 = vld [vmem:[#allocation7 + $0x88] sm:$0xff]
    %v673 = vld [vmem:[#allocation7 + $0x90] sm:$0xff]
    %v674 = vld [vmem:[#allocation7 + $0x98] sm:$0xff]
    %v675 = vld [vmem:[#allocation7 + $0xa0] sm:$0xff]
    %v676 = vld [vmem:[#allocation7 + $0xa8] sm:$0xff]
    %v677 = vld [vmem:[#allocation7 + $0xb0] sm:$0xff]
    %v678 = vld [vmem:[#allocation7 + $0xb8] sm:$0xff]
    %v679 = vld [vmem:[#allocation7 + $0xc0] sm:$0xff]
    %v680 = vld [vmem:[#allocation7 + $0xc8] sm:$0xff]
    %v681 = vld [vmem:[#allocation7 + $0xd0] sm:$0xff]
    %v682 = vld [vmem:[#allocation7 + $0xd8] sm:$0xff]
    %v683 = vld [vmem:[#allocation7 + $0xe0] sm:$0xff]
    %v684 = vld [vmem:[#allocation7 + $0xe8] sm:$0xff]
    %v685 = vld [vmem:[#allocation7 + $0xf0] sm:$0xff]
    %v686 = vld [vmem:[#allocation7 + $0xf8] sm:$0xff]
    %v687 = vld [vmem:[#allocation8] sm:$0x77]
    %v689 = vlaneseq
    %v690 = vshrl.u32 %v689, 7
    %v691 = vsub.s32 0, %v690
    %v692 = vrot.slane %v687, %v691
    %v693 = vlaneseq
    %v694 = vshrl.u32 %v693, 7
    %v695 = vsub.s32 4, %v694
    %v696 = vrot.slane %v687, %v695
    %v699 = vlaneseq
    %v700 = vshrl.u32 %v699, 7
    %v701 = vsub.s32 0, %v700
    %v702 = vrot.slane %v692, %v701
    %v703 = vlaneseq
    %v704 = vshrl.u32 %v703, 7
    %v705 = vsub.s32 0, %v704
    %v706 = vrot.slane %v696, %v705
    %v707 = vand.u32 %v686, 4294901760
    %708 = vmatprep.subr.mxu0 %v707
    %v709 = vand.u32 %v685, 4294901760
    %710 = vmatpush1.msra.mxu0 %v709
    %v711 = vand.u32 %v684, 4294901760
    %712 = vmatprep.subr.mxu0 %v711
    %v713 = vand.u32 %v683, 4294901760
    %714 = vmatpush1.msra.mxu0 %v713
    %v715 = vand.u32 %v682, 4294901760
    %716 = vmatprep.subr.mxu0 %v715
    %v717 = vand.u32 %v681, 4294901760
    %718 = vmatpush1.msra.mxu0 %v717
    %v719 = vand.u32 %v680, 4294901760
    %720 = vmatprep.subr.mxu0 %v719
    %v721 = vand.u32 %v679, 4294901760
    %722 = vmatpush1.msra.mxu0 %v721
    %v723 = vand.u32 %v678, 4294901760
    %724 = vmatprep.subr.mxu0 %v723
    %v725 = vand.u32 %v677, 4294901760
    %726 = vmatpush1.msra.mxu0 %v725
    %v727 = vand.u32 %v676, 4294901760
    %728 = vmatprep.subr.mxu0 %v727
    %v729 = vand.u32 %v675, 4294901760
    %730 = vmatpush1.msra.mxu0 %v729
    %v731 = vand.u32 %v674, 4294901760
    %732 = vmatprep.subr.mxu0 %v731
    %v733 = vand.u32 %v673, 4294901760
    %734 = vmatpush1.msra.mxu0 %v733
    %v735 = vand.u32 %v672, 4294901760
    %736 = vmatprep.subr.mxu0 %v735
    %v737 = vand.u32 %v671, 4294901760
    %738 = vmatpush1.msra.mxu0 %v737
    %v739 = vand.u32 %v670, 4294901760
    %740 = vmatprep.subr.mxu0 %v739
    %v741 = vand.u32 %v669, 4294901760
    %742 = vmatpush1.msra.mxu0 %v741
    %v743 = vand.u32 %v668, 4294901760
    %744 = vmatprep.subr.mxu0 %v743
    %v745 = vand.u32 %v667, 4294901760
    %746 = vmatpush1.msra.mxu0 %v745
    %v747 = vand.u32 %v666, 4294901760
    %748 = vmatprep.subr.mxu0 %v747
    %v749 = vand.u32 %v665, 4294901760
    %750 = vmatpush1.msra.mxu0 %v749
    %v751 = vand.u32 %v664, 4294901760
    %752 = vmatprep.subr.mxu0 %v751
    %v753 = vand.u32 %v663, 4294901760
    %754 = vmatpush1.msra.mxu0 %v753
    %v755 = vand.u32 %v662, 4294901760
    %756 = vmatprep.subr.mxu0 %v755
    %v757 = vand.u32 %v661, 4294901760
    %758 = vmatpush1.msra.mxu0 %v757
    %v759 = vand.u32 %v660, 4294901760
    %760 = vmatprep.subr.mxu0 %v759
    %v761 = vand.u32 %v659, 4294901760
    %762 = vmatpush1.msra.mxu0 %v761
    %v763 = vand.u32 %v658, 4294901760
    %764 = vmatprep.subr.mxu0 %v763
    %v765 = vand.u32 %v657, 4294901760
    %766 = vmatpush1.msra.mxu0 %v765
    %v767 = vand.u32 %v656, 4294901760
    %768 = vmatprep.subr.mxu0 %v767
    %v769 = vand.u32 %v655, 4294901760
    %770 = vmatpush1.msra.mxu0 %v769
    %771 = vmatprep.subr.mxu0 0.0
    %772 = vmatpush2.msra.mxu0 0.0
    %773 = vmatprep.subr.mxu0 0.0
    %774 = vmatpush2.msra.mxu0 0.0
    %775 = vmatprep.subr.mxu0 0.0
    %776 = vmatpush2.msra.mxu0 0.0
    %777 = vmatprep.subr.mxu0 0.0
    %778 = vmatpush2.msra.mxu0 0.0
    %779 = vmatprep.subr.mxu0 0.0
    %780 = vmatpush2.msra.mxu0 0.0
    %781 = vmatprep.subr.mxu0 0.0
    %782 = vmatpush2.msra.mxu0 0.0
    %783 = vmatprep.subr.mxu0 0.0
    %784 = vmatpush2.msra.mxu0 0.0
    %785 = vmatprep.subr.mxu0 0.0
    %786 = vmatpush2.msra.mxu0 0.0
    %787 = vmatprep.subr.mxu0 0.0
    %788 = vmatpush2.msra.mxu0 0.0
    %789 = vmatprep.subr.mxu0 0.0
    %790 = vmatpush2.msra.mxu0 0.0
    %791 = vmatprep.subr.mxu0 0.0
    %792 = vmatpush2.msra.mxu0 0.0
    %793 = vmatprep.subr.mxu0 0.0
    %794 = vmatpush2.msra.mxu0 0.0
    %795 = vmatprep.subr.mxu0 0.0
    %796 = vmatpush2.msra.mxu0 0.0
    %797 = vmatprep.subr.mxu0 0.0
    %798 = vmatpush2.msra.mxu0 0.0
    %799 = vmatprep.subr.mxu0 0.0
    %800 = vmatpush2.msra.mxu0 0.0
    %801 = vmatprep.subr.mxu0 0.0
    %802 = vmatpush2.msra.mxu0 0.0
    %803 = vmatprep.mubr.f32.mxu0 0.0
    %v804 = vand.u32 %v653, 4294901760
    %v805 = vsub.f32 %v653, %v804
    %v806 = vand.u32 %v805, 4294901760
    %v807 = vsub.f32 %v805, %v806
    %v808 = vand.u32 %v807, 4294901760
    %809 = vmatmul.mubr.f32.gmra.mxu0 %v808
    %v810 = vpop.f32.mrf.mxu0
    %v811 = vadd.f32 %v702, %v810
    %v812 = vpop.f32.mrf.mxu0
    %v813 = vadd.f32 %v706, %v812
    %814 = vmatprep.mubr.f32.mxu0 0.0
    %v815 = vand.u32 %v654, 4294901760
    %v816 = vsub.f32 %v654, %v815
    %v817 = vand.u32 %v816, 4294901760
    %v818 = vsub.f32 %v816, %v817
    %v819 = vand.u32 %v818, 4294901760
    %820 = vmatmul.mubr.f32.gmra.mxu0 %v819
    %v821 = vpop.f32.mrf.mxu0
    %v822 = vadd.f32 %v702, %v821
    %v823 = vpop.f32.mrf.mxu0
    %v824 = vadd.f32 %v706, %v823
    %825 = vdwg.mxu0
    %v826 = vand.u32 %v686, 4294901760
    %v827 = vsub.f32 %v686, %v826
    %v828 = vand.u32 %v827, 4294901760
    %v829 = vsub.f32 %v827, %v828
    %v830 = vand.u32 %v829, 4294901760
    %831 = vmatprep.subr.mxu0 %v830
    %v832 = vand.u32 %v685, 4294901760
    %v833 = vsub.f32 %v685, %v832
    %v834 = vand.u32 %v833, 4294901760
    %v835 = vsub.f32 %v833, %v834
    %v836 = vand.u32 %v835, 4294901760
    %837 = vmatpush1.msra.mxu0 %v836
    %v838 = vand.u32 %v684, 4294901760
    %v839 = vsub.f32 %v684, %v838
    %v840 = vand.u32 %v839, 4294901760
    %v841 = vsub.f32 %v839, %v840
    %v842 = vand.u32 %v841, 4294901760
    %843 = vmatprep.subr.mxu0 %v842
    %v844 = vand.u32 %v683, 4294901760
    %v845 = vsub.f32 %v683, %v844
    %v846 = vand.u32 %v845, 4294901760
    %v847 = vsub.f32 %v845, %v846
    %v848 = vand.u32 %v847, 4294901760
    %849 = vmatpush1.msra.mxu0 %v848
    %v850 = vand.u32 %v682, 4294901760
    %v851 = vsub.f32 %v682, %v850
    %v852 = vand.u32 %v851, 4294901760
    %v853 = vsub.f32 %v851, %v852
    %v854 = vand.u32 %v853, 4294901760
    %855 = vmatprep.subr.mxu0 %v854
    %v856 = vand.u32 %v681, 4294901760
    %v857 = vsub.f32 %v681, %v856
    %v858 = vand.u32 %v857, 4294901760
    %v859 = vsub.f32 %v857, %v858
    %v860 = vand.u32 %v859, 4294901760
    %861 = vmatpush1.msra.mxu0 %v860
    %v862 = vand.u32 %v680, 4294901760
    %v863 = vsub.f32 %v680, %v862
    %v864 = vand.u32 %v863, 4294901760
    %v865 = vsub.f32 %v863, %v864
    %v866 = vand.u32 %v865, 4294901760
    %867 = vmatprep.subr.mxu0 %v866
    %v868 = vand.u32 %v679, 4294901760
    %v869 = vsub.f32 %v679, %v868
    %v870 = vand.u32 %v869, 4294901760
    %v871 = vsub.f32 %v869, %v870
    %v872 = vand.u32 %v871, 4294901760
    %873 = vmatpush1.msra.mxu0 %v872
    %v874 = vand.u32 %v678, 4294901760
    %v875 = vsub.f32 %v678, %v874
    %v876 = vand.u32 %v875, 4294901760
    %v877 = vsub.f32 %v875, %v876
    %v878 = vand.u32 %v877, 4294901760
    %879 = vmatprep.subr.mxu0 %v878
    %v880 = vand.u32 %v677, 4294901760
    %v881 = vsub.f32 %v677, %v880
    %v882 = vand.u32 %v881, 4294901760
    %v883 = vsub.f32 %v881, %v882
    %v884 = vand.u32 %v883, 4294901760
    %885 = vmatpush1.msra.mxu0 %v884
    %v886 = vand.u32 %v676, 4294901760
    %v887 = vsub.f32 %v676, %v886
    %v888 = vand.u32 %v887, 4294901760
    %v889 = vsub.f32 %v887, %v888
    %v890 = vand.u32 %v889, 4294901760
    %891 = vmatprep.subr.mxu0 %v890
    %v892 = vand.u32 %v675, 4294901760
    %v893 = vsub.f32 %v675, %v892
    %v894 = vand.u32 %v893, 4294901760
    %v895 = vsub.f32 %v893, %v894
    %v896 = vand.u32 %v895, 4294901760
    %897 = vmatpush1.msra.mxu0 %v896
    %v898 = vand.u32 %v674, 4294901760
    %v899 = vsub.f32 %v674, %v898
    %v900 = vand.u32 %v899, 4294901760
    %v901 = vsub.f32 %v899, %v900
    %v902 = vand.u32 %v901, 4294901760
    %903 = vmatprep.subr.mxu0 %v902
    %v904 = vand.u32 %v673, 4294901760
    %v905 = vsub.f32 %v673, %v904
    %v906 = vand.u32 %v905, 4294901760
    %v907 = vsub.f32 %v905, %v906
    %v908 = vand.u32 %v907, 4294901760
    %909 = vmatpush1.msra.mxu0 %v908
    %v910 = vand.u32 %v672, 4294901760
    %v911 = vsub.f32 %v672, %v910
    %v912 = vand.u32 %v911, 4294901760
    %v913 = vsub.f32 %v911, %v912
    %v914 = vand.u32 %v913, 4294901760
    %915 = vmatprep.subr.mxu0 %v914
    %v916 = vand.u32 %v671, 4294901760
    %v917 = vsub.f32 %v671, %v916
    %v918 = vand.u32 %v917, 4294901760
    %v919 = vsub.f32 %v917, %v918
    %v920 = vand.u32 %v919, 4294901760
    %921 = vmatpush1.msra.mxu0 %v920
    %v922 = vand.u32 %v670, 4294901760
    %v923 = vsub.f32 %v670, %v922
    %v924 = vand.u32 %v923, 4294901760
    %v925 = vsub.f32 %v923, %v924
    %v926 = vand.u32 %v925, 4294901760
    %927 = vmatprep.subr.mxu0 %v926
    %v928 = vand.u32 %v669, 4294901760
    %v929 = vsub.f32 %v669, %v928
    %v930 = vand.u32 %v929, 4294901760
    %v931 = vsub.f32 %v929, %v930
    %v932 = vand.u32 %v931, 4294901760
    %933 = vmatpush1.msra.mxu0 %v932
    %v934 = vand.u32 %v668, 4294901760
    %v935 = vsub.f32 %v668, %v934
    %v936 = vand.u32 %v935, 4294901760
    %v937 = vsub.f32 %v935, %v936
    %v938 = vand.u32 %v937, 4294901760
    %939 = vmatprep.subr.mxu0 %v938
    %v940 = vand.u32 %v667, 4294901760
    %v941 = vsub.f32 %v667, %v940
    %v942 = vand.u32 %v941, 4294901760
    %v943 = vsub.f32 %v941, %v942
    %v944 = vand.u32 %v943, 4294901760
    %945 = vmatpush1.msra.mxu0 %v944
    %v946 = vand.u32 %v666, 4294901760
    %v947 = vsub.f32 %v666, %v946
    %v948 = vand.u32 %v947, 4294901760
    %v949 = vsub.f32 %v947, %v948
    %v950 = vand.u32 %v949, 4294901760
    %951 = vmatprep.subr.mxu0 %v950
    %v952 = vand.u32 %v665, 4294901760
    %v953 = vsub.f32 %v665, %v952
    %v954 = vand.u32 %v953, 4294901760
    %v955 = vsub.f32 %v953, %v954
    %v956 = vand.u32 %v955, 4294901760
    %957 = vmatpush1.msra.mxu0 %v956
    %v958 = vand.u32 %v664, 4294901760
    %v959 = vsub.f32 %v664, %v958
    %v960 = vand.u32 %v959, 4294901760
    %v961 = vsub.f32 %v959, %v960
    %v962 = vand.u32 %v961, 4294901760
    %963 = vmatprep.subr.mxu0 %v962
    %v964 = vand.u32 %v663, 4294901760
    %v965 = vsub.f32 %v663, %v964
    %v966 = vand.u32 %v965, 4294901760
    %v967 = vsub.f32 %v965, %v966
    %v968 = vand.u32 %v967, 4294901760
    %969 = vmatpush1.msra.mxu0 %v968
    %v970 = vand.u32 %v662, 4294901760
    %v971 = vsub.f32 %v662, %v970
    %v972 = vand.u32 %v971, 4294901760
    %v973 = vsub.f32 %v971, %v972
    %v974 = vand.u32 %v973, 4294901760
    %975 = vmatprep.subr.mxu0 %v974
    %v976 = vand.u32 %v661, 4294901760
    %v977 = vsub.f32 %v661, %v976
    %v978 = vand.u32 %v977, 4294901760
    %v979 = vsub.f32 %v977, %v978
    %v980 = vand.u32 %v979, 4294901760
    %981 = vmatpush1.msra.mxu0 %v980
    %v982 = vand.u32 %v660, 4294901760
    %v983 = vsub.f32 %v660, %v982
    %v984 = vand.u32 %v983, 4294901760
    %v985 = vsub.f32 %v983, %v984
    %v986 = vand.u32 %v985, 4294901760
    %987 = vmatprep.subr.mxu0 %v986
    %v988 = vand.u32 %v659, 4294901760
    %v989 = vsub.f32 %v659, %v988
    %v990 = vand.u32 %v989, 4294901760
    %v991 = vsub.f32 %v989, %v990
    %v992 = vand.u32 %v991, 4294901760
    %993 = vmatpush1.msra.mxu0 %v992
    %v994 = vand.u32 %v658, 4294901760
    %v995 = vsub.f32 %v658, %v994
    %v996 = vand.u32 %v995, 4294901760
    %v997 = vsub.f32 %v995, %v996
    %v998 = vand.u32 %v997, 4294901760
    %999 = vmatprep.subr.mxu0 %v998
    %v1000 = vand.u32 %v657, 4294901760
    %v1001 = vsub.f32 %v657, %v1000
    %v1002 = vand.u32 %v1001, 4294901760
    %v1003 = vsub.f32 %v1001, %v1002
    %v1004 = vand.u32 %v1003, 4294901760
    %1005 = vmatpush1.msra.mxu0 %v1004
    %v1006 = vand.u32 %v656, 4294901760
    %v1007 = vsub.f32 %v656, %v1006
    %v1008 = vand.u32 %v1007, 4294901760
    %v1009 = vsub.f32 %v1007, %v1008
    %v1010 = vand.u32 %v1009, 4294901760
    %1011 = vmatprep.subr.mxu0 %v1010
    %v1012 = vand.u32 %v655, 4294901760
    %v1013 = vsub.f32 %v655, %v1012
    %v1014 = vand.u32 %v1013, 4294901760
    %v1015 = vsub.f32 %v1013, %v1014
    %v1016 = vand.u32 %v1015, 4294901760
    %1017 = vmatpush1.msra.mxu0 %v1016
    %1018 = vmatprep.subr.mxu0 0.0
    %1019 = vmatpush2.msra.mxu0 0.0
    %1020 = vmatprep.subr.mxu0 0.0
    %1021 = vmatpush2.msra.mxu0 0.0
    %1022 = vmatprep.subr.mxu0 0.0
    %1023 = vmatpush2.msra.mxu0 0.0
    %1024 = vmatprep.subr.mxu0 0.0
    %1025 = vmatpush2.msra.mxu0 0.0
    %1026 = vmatprep.subr.mxu0 0.0
    %1027 = vmatpush2.msra.mxu0 0.0
    %1028 = vmatprep.subr.mxu0 0.0
    %1029 = vmatpush2.msra.mxu0 0.0
    %1030 = vmatprep.subr.mxu0 0.0
    %1031 = vmatpush2.msra.mxu0 0.0
    %1032 = vmatprep.subr.mxu0 0.0
    %1033 = vmatpush2.msra.mxu0 0.0
    %1034 = vmatprep.subr.mxu0 0.0
    %1035 = vmatpush2.msra.mxu0 0.0
    %1036 = vmatprep.subr.mxu0 0.0
    %1037 = vmatpush2.msra.mxu0 0.0
    %1038 = vmatprep.subr.mxu0 0.0
    %1039 = vmatpush2.msra.mxu0 0.0
    %1040 = vmatprep.subr.mxu0 0.0
    %1041 = vmatpush2.msra.mxu0 0.0
    %1042 = vmatprep.subr.mxu0 0.0
    %1043 = vmatpush2.msra.mxu0 0.0
    %1044 = vmatprep.subr.mxu0 0.0
    %1045 = vmatpush2.msra.mxu0 0.0
    %1046 = vmatprep.subr.mxu0 0.0
    %1047 = vmatpush2.msra.mxu0 0.0
    %1048 = vmatprep.subr.mxu0 0.0
    %1049 = vmatpush2.msra.mxu0 0.0
    %1050 = vmatprep.mubr.f32.mxu0 0.0
    %v1051 = vand.u32 %v653, 4294901760
    %1052 = vmatmul.mubr.f32.gmra.mxu0 %v1051
    %v1053 = vpop.f32.mrf.mxu0
    %v1054 = vadd.f32 %v811, %v1053
    %v1055 = vpop.f32.mrf.mxu0
    %v1056 = vadd.f32 %v813, %v1055
    %1057 = vmatprep.mubr.f32.mxu0 0.0
    %v1058 = vand.u32 %v654, 4294901760
    %1059 = vmatmul.mubr.f32.gmra.mxu0 %v1058
    %v1060 = vpop.f32.mrf.mxu0
    %v1061 = vadd.f32 %v822, %v1060
    %v1062 = vpop.f32.mrf.mxu0
    %v1063 = vadd.f32 %v824, %v1062
    %1064 = vdwg.mxu0
    %v1065 = vand.u32 %v686, 4294901760
    %v1066 = vsub.f32 %v686, %v1065
    %1067 = vmatprep.subr.mxu0 %v1066
    %v1068 = vand.u32 %v685, 4294901760
    %v1069 = vsub.f32 %v685, %v1068
    %1070 = vmatpush1.msra.mxu0 %v1069
    %v1071 = vand.u32 %v684, 4294901760
    %v1072 = vsub.f32 %v684, %v1071
    %1073 = vmatprep.subr.mxu0 %v1072
    %v1074 = vand.u32 %v683, 4294901760
    %v1075 = vsub.f32 %v683, %v1074
    %1076 = vmatpush1.msra.mxu0 %v1075
    %v1077 = vand.u32 %v682, 4294901760
    %v1078 = vsub.f32 %v682, %v1077
    %1079 = vmatprep.subr.mxu0 %v1078
    %v1080 = vand.u32 %v681, 4294901760
    %v1081 = vsub.f32 %v681, %v1080
    %1082 = vmatpush1.msra.mxu0 %v1081
    %v1083 = vand.u32 %v680, 4294901760
    %v1084 = vsub.f32 %v680, %v1083
    %1085 = vmatprep.subr.mxu0 %v1084
    %v1086 = vand.u32 %v679, 4294901760
    %v1087 = vsub.f32 %v679, %v1086
    %1088 = vmatpush1.msra.mxu0 %v1087
    %v1089 = vand.u32 %v678, 4294901760
    %v1090 = vsub.f32 %v678, %v1089
    %1091 = vmatprep.subr.mxu0 %v1090
    %v1092 = vand.u32 %v677, 4294901760
    %v1093 = vsub.f32 %v677, %v1092
    %1094 = vmatpush1.msra.mxu0 %v1093
    %v1095 = vand.u32 %v676, 4294901760
    %v1096 = vsub.f32 %v676, %v1095
    %1097 = vmatprep.subr.mxu0 %v1096
    %v1098 = vand.u32 %v675, 4294901760
    %v1099 = vsub.f32 %v675, %v1098
    %1100 = vmatpush1.msra.mxu0 %v1099
    %v1101 = vand.u32 %v674, 4294901760
    %v1102 = vsub.f32 %v674, %v1101
    %1103 = vmatprep.subr.mxu0 %v1102
    %v1104 = vand.u32 %v673, 4294901760
    %v1105 = vsub.f32 %v673, %v1104
    %1106 = vmatpush1.msra.mxu0 %v1105
    %v1107 = vand.u32 %v672, 4294901760
    %v1108 = vsub.f32 %v672, %v1107
    %1109 = vmatprep.subr.mxu0 %v1108
    %v1110 = vand.u32 %v671, 4294901760
    %v1111 = vsub.f32 %v671, %v1110
    %1112 = vmatpush1.msra.mxu0 %v1111
    %v1113 = vand.u32 %v670, 4294901760
    %v1114 = vsub.f32 %v670, %v1113
    %1115 = vmatprep.subr.mxu0 %v1114
    %v1116 = vand.u32 %v669, 4294901760
    %v1117 = vsub.f32 %v669, %v1116
    %1118 = vmatpush1.msra.mxu0 %v1117
    %v1119 = vand.u32 %v668, 4294901760
    %v1120 = vsub.f32 %v668, %v1119
    %1121 = vmatprep.subr.mxu0 %v1120
    %v1122 = vand.u32 %v667, 4294901760
    %v1123 = vsub.f32 %v667, %v1122
    %1124 = vmatpush1.msra.mxu0 %v1123
    %v1125 = vand.u32 %v666, 4294901760
    %v1126 = vsub.f32 %v666, %v1125
    %1127 = vmatprep.subr.mxu0 %v1126
    %v1128 = vand.u32 %v665, 4294901760
    %v1129 = vsub.f32 %v665, %v1128
    %1130 = vmatpush1.msra.mxu0 %v1129
    %v1131 = vand.u32 %v664, 4294901760
    %v1132 = vsub.f32 %v664, %v1131
    %1133 = vmatprep.subr.mxu0 %v1132
    %v1134 = vand.u32 %v663, 4294901760
    %v1135 = vsub.f32 %v663, %v1134
    %1136 = vmatpush1.msra.mxu0 %v1135
    %v1137 = vand.u32 %v662, 4294901760
    %v1138 = vsub.f32 %v662, %v1137
    %1139 = vmatprep.subr.mxu0 %v1138
    %v1140 = vand.u32 %v661, 4294901760
    %v1141 = vsub.f32 %v661, %v1140
    %1142 = vmatpush1.msra.mxu0 %v1141
    %v1143 = vand.u32 %v660, 4294901760
    %v1144 = vsub.f32 %v660, %v1143
    %1145 = vmatprep.subr.mxu0 %v1144
    %v1146 = vand.u32 %v659, 4294901760
    %v1147 = vsub.f32 %v659, %v1146
    %1148 = vmatpush1.msra.mxu0 %v1147
    %v1149 = vand.u32 %v658, 4294901760
    %v1150 = vsub.f32 %v658, %v1149
    %1151 = vmatprep.subr.mxu0 %v1150
    %v1152 = vand.u32 %v657, 4294901760
    %v1153 = vsub.f32 %v657, %v1152
    %1154 = vmatpush1.msra.mxu0 %v1153
    %v1155 = vand.u32 %v656, 4294901760
    %v1156 = vsub.f32 %v656, %v1155
    %1157 = vmatprep.subr.mxu0 %v1156
    %v1158 = vand.u32 %v655, 4294901760
    %v1159 = vsub.f32 %v655, %v1158
    %1160 = vmatpush1.msra.mxu0 %v1159
    %1161 = vmatprep.subr.mxu0 0.0
    %1162 = vmatpush2.msra.mxu0 0.0
    %1163 = vmatprep.subr.mxu0 0.0
    %1164 = vmatpush2.msra.mxu0 0.0
    %1165 = vmatprep.subr.mxu0 0.0
    %1166 = vmatpush2.msra.mxu0 0.0
    %1167 = vmatprep.subr.mxu0 0.0
    %1168 = vmatpush2.msra.mxu0 0.0
    %1169 = vmatprep.subr.mxu0 0.0
    %1170 = vmatpush2.msra.mxu0 0.0
    %1171 = vmatprep.subr.mxu0 0.0
    %1172 = vmatpush2.msra.mxu0 0.0
    %1173 = vmatprep.subr.mxu0 0.0
    %1174 = vmatpush2.msra.mxu0 0.0
    %1175 = vmatprep.subr.mxu0 0.0
    %1176 = vmatpush2.msra.mxu0 0.0
    %1177 = vmatprep.subr.mxu0 0.0
    %1178 = vmatpush2.msra.mxu0 0.0
    %1179 = vmatprep.subr.mxu0 0.0
    %1180 = vmatpush2.msra.mxu0 0.0
    %1181 = vmatprep.subr.mxu0 0.0
    %1182 = vmatpush2.msra.mxu0 0.0
    %1183 = vmatprep.subr.mxu0 0.0
    %1184 = vmatpush2.msra.mxu0 0.0
    %1185 = vmatprep.subr.mxu0 0.0
    %1186 = vmatpush2.msra.mxu0 0.0
    %1187 = vmatprep.subr.mxu0 0.0
    %1188 = vmatpush2.msra.mxu0 0.0
    %1189 = vmatprep.subr.mxu0 0.0
    %1190 = vmatpush2.msra.mxu0 0.0
    %1191 = vmatprep.subr.mxu0 0.0
    %1192 = vmatpush2.msra.mxu0 0.0
    %1193 = vmatprep.mubr.f32.mxu0 0.0
    %v1194 = vand.u32 %v653, 4294901760
    %v1195 = vsub.f32 %v653, %v1194
    %1196 = vmatmul.mubr.f32.gmra.mxu0 %v1195
    %v1197 = vpop.f32.mrf.mxu0
    %v1198 = vadd.f32 %v1054, %v1197
    %v1199 = vpop.f32.mrf.mxu0
    %v1200 = vadd.f32 %v1056, %v1199
    %1201 = vmatprep.mubr.f32.mxu0 0.0
    %v1202 = vand.u32 %v654, 4294901760
    %v1203 = vsub.f32 %v654, %v1202
    %1204 = vmatmul.mubr.f32.gmra.mxu0 %v1203
    %v1205 = vpop.f32.mrf.mxu0
    %v1206 = vadd.f32 %v1061, %v1205
    %v1207 = vpop.f32.mrf.mxu0
    %v1208 = vadd.f32 %v1063, %v1207
    %1209 = vdwg.mxu0
    %v1210 = vand.u32 %v686, 4294901760
    %1211 = vmatprep.subr.mxu0 %v1210
    %v1212 = vand.u32 %v685, 4294901760
    %1213 = vmatpush1.msra.mxu0 %v1212
    %v1214 = vand.u32 %v684, 4294901760
    %1215 = vmatprep.subr.mxu0 %v1214
    %v1216 = vand.u32 %v683, 4294901760
    %1217 = vmatpush1.msra.mxu0 %v1216
    %v1218 = vand.u32 %v682, 4294901760
    %1219 = vmatprep.subr.mxu0 %v1218
    %v1220 = vand.u32 %v681, 4294901760
    %1221 = vmatpush1.msra.mxu0 %v1220
    %v1222 = vand.u32 %v680, 4294901760
    %1223 = vmatprep.subr.mxu0 %v1222
    %v1224 = vand.u32 %v679, 4294901760
    %1225 = vmatpush1.msra.mxu0 %v1224
    %v1226 = vand.u32 %v678, 4294901760
    %1227 = vmatprep.subr.mxu0 %v1226
    %v1228 = vand.u32 %v677, 4294901760
    %1229 = vmatpush1.msra.mxu0 %v1228
    %v1230 = vand.u32 %v676, 4294901760
    %1231 = vmatprep.subr.mxu0 %v1230
    %v1232 = vand.u32 %v675, 4294901760
    %1233 = vmatpush1.msra.mxu0 %v1232
    %v1234 = vand.u32 %v674, 4294901760
    %1235 = vmatprep.subr.mxu0 %v1234
    %v1236 = vand.u32 %v673, 4294901760
    %1237 = vmatpush1.msra.mxu0 %v1236
    %v1238 = vand.u32 %v672, 4294901760
    %1239 = vmatprep.subr.mxu0 %v1238
    %v1240 = vand.u32 %v671, 4294901760
    %1241 = vmatpush1.msra.mxu0 %v1240
    %v1242 = vand.u32 %v670, 4294901760
    %1243 = vmatprep.subr.mxu0 %v1242
    %v1244 = vand.u32 %v669, 4294901760
    %1245 = vmatpush1.msra.mxu0 %v1244
    %v1246 = vand.u32 %v668, 4294901760
    %1247 = vmatprep.subr.mxu0 %v1246
    %v1248 = vand.u32 %v667, 4294901760
    %1249 = vmatpush1.msra.mxu0 %v1248
    %v1250 = vand.u32 %v666, 4294901760
    %1251 = vmatprep.subr.mxu0 %v1250
    %v1252 = vand.u32 %v665, 4294901760
    %1253 = vmatpush1.msra.mxu0 %v1252
    %v1254 = vand.u32 %v664, 4294901760
    %1255 = vmatprep.subr.mxu0 %v1254
    %v1256 = vand.u32 %v663, 4294901760
    %1257 = vmatpush1.msra.mxu0 %v1256
    %v1258 = vand.u32 %v662, 4294901760
    %1259 = vmatprep.subr.mxu0 %v1258
    %v1260 = vand.u32 %v661, 4294901760
    %1261 = vmatpush1.msra.mxu0 %v1260
    %v1262 = vand.u32 %v660, 4294901760
    %1263 = vmatprep.subr.mxu0 %v1262
    %v1264 = vand.u32 %v659, 4294901760
    %1265 = vmatpush1.msra.mxu0 %v1264
    %v1266 = vand.u32 %v658, 4294901760
    %1267 = vmatprep.subr.mxu0 %v1266
    %v1268 = vand.u32 %v657, 4294901760
    %1269 = vmatpush1.msra.mxu0 %v1268
    %v1270 = vand.u32 %v656, 4294901760
    %1271 = vmatprep.subr.mxu0 %v1270
    %v1272 = vand.u32 %v655, 4294901760
    %1273 = vmatpush1.msra.mxu0 %v1272
    %1274 = vmatprep.subr.mxu0 0.0
    %1275 = vmatpush2.msra.mxu0 0.0
    %1276 = vmatprep.subr.mxu0 0.0
    %1277 = vmatpush2.msra.mxu0 0.0
    %1278 = vmatprep.subr.mxu0 0.0
    %1279 = vmatpush2.msra.mxu0 0.0
    %1280 = vmatprep.subr.mxu0 0.0
    %1281 = vmatpush2.msra.mxu0 0.0
    %1282 = vmatprep.subr.mxu0 0.0
    %1283 = vmatpush2.msra.mxu0 0.0
    %1284 = vmatprep.subr.mxu0 0.0
    %1285 = vmatpush2.msra.mxu0 0.0
    %1286 = vmatprep.subr.mxu0 0.0
    %1287 = vmatpush2.msra.mxu0 0.0
    %1288 = vmatprep.subr.mxu0 0.0
    %1289 = vmatpush2.msra.mxu0 0.0
    %1290 = vmatprep.subr.mxu0 0.0
    %1291 = vmatpush2.msra.mxu0 0.0
    %1292 = vmatprep.subr.mxu0 0.0
    %1293 = vmatpush2.msra.mxu0 0.0
    %1294 = vmatprep.subr.mxu0 0.0
    %1295 = vmatpush2.msra.mxu0 0.0
    %1296 = vmatprep.subr.mxu0 0.0
    %1297 = vmatpush2.msra.mxu0 0.0
    %1298 = vmatprep.subr.mxu0 0.0
    %1299 = vmatpush2.msra.mxu0 0.0
    %1300 = vmatprep.subr.mxu0 0.0
    %1301 = vmatpush2.msra.mxu0 0.0
    %1302 = vmatprep.subr.mxu0 0.0
    %1303 = vmatpush2.msra.mxu0 0.0
    %1304 = vmatprep.subr.mxu0 0.0
    %1305 = vmatpush2.msra.mxu0 0.0
    %1306 = vmatprep.mubr.f32.mxu0 0.0
    %v1307 = vand.u32 %v653, 4294901760
    %v1308 = vsub.f32 %v653, %v1307
    %v1309 = vand.u32 %v1308, 4294901760
    %1310 = vmatmul.mubr.f32.gmra.mxu0 %v1309
    %v1311 = vpop.f32.mrf.mxu0
    %v1312 = vadd.f32 %v1198, %v1311
    %v1313 = vpop.f32.mrf.mxu0
    %v1314 = vadd.f32 %v1200, %v1313
    %1315 = vmatprep.mubr.f32.mxu0 0.0
    %v1316 = vand.u32 %v654, 4294901760
    %v1317 = vsub.f32 %v654, %v1316
    %v1318 = vand.u32 %v1317, 4294901760
    %1319 = vmatmul.mubr.f32.gmra.mxu0 %v1318
    %v1320 = vpop.f32.mrf.mxu0
    %v1321 = vadd.f32 %v1206, %v1320
    %v1322 = vpop.f32.mrf.mxu0
    %v1323 = vadd.f32 %v1208, %v1322
    %1324 = vdwg.mxu0
    %v1325 = vand.u32 %v686, 4294901760
    %v1326 = vsub.f32 %v686, %v1325
    %v1327 = vand.u32 %v1326, 4294901760
    %1328 = vmatprep.subr.mxu0 %v1327
    %v1329 = vand.u32 %v685, 4294901760
    %v1330 = vsub.f32 %v685, %v1329
    %v1331 = vand.u32 %v1330, 4294901760
    %1332 = vmatpush1.msra.mxu0 %v1331
    %v1333 = vand.u32 %v684, 4294901760
    %v1334 = vsub.f32 %v684, %v1333
    %v1335 = vand.u32 %v1334, 4294901760
    %1336 = vmatprep.subr.mxu0 %v1335
    %v1337 = vand.u32 %v683, 4294901760
    %v1338 = vsub.f32 %v683, %v1337
    %v1339 = vand.u32 %v1338, 4294901760
    %1340 = vmatpush1.msra.mxu0 %v1339
    %v1341 = vand.u32 %v682, 4294901760
    %v1342 = vsub.f32 %v682, %v1341
    %v1343 = vand.u32 %v1342, 4294901760
    %1344 = vmatprep.subr.mxu0 %v1343
    %v1345 = vand.u32 %v681, 4294901760
    %v1346 = vsub.f32 %v681, %v1345
    %v1347 = vand.u32 %v1346, 4294901760
    %1348 = vmatpush1.msra.mxu0 %v1347
    %v1349 = vand.u32 %v680, 4294901760
    %v1350 = vsub.f32 %v680, %v1349
    %v1351 = vand.u32 %v1350, 4294901760
    %1352 = vmatprep.subr.mxu0 %v1351
    %v1353 = vand.u32 %v679, 4294901760
    %v1354 = vsub.f32 %v679, %v1353
    %v1355 = vand.u32 %v1354, 4294901760
    %1356 = vmatpush1.msra.mxu0 %v1355
    %v1357 = vand.u32 %v678, 4294901760
    %v1358 = vsub.f32 %v678, %v1357
    %v1359 = vand.u32 %v1358, 4294901760
    %1360 = vmatprep.subr.mxu0 %v1359
    %v1361 = vand.u32 %v677, 4294901760
    %v1362 = vsub.f32 %v677, %v1361
    %v1363 = vand.u32 %v1362, 4294901760
    %1364 = vmatpush1.msra.mxu0 %v1363
    %v1365 = vand.u32 %v676, 4294901760
    %v1366 = vsub.f32 %v676, %v1365
    %v1367 = vand.u32 %v1366, 4294901760
    %1368 = vmatprep.subr.mxu0 %v1367
    %v1369 = vand.u32 %v675, 4294901760
    %v1370 = vsub.f32 %v675, %v1369
    %v1371 = vand.u32 %v1370, 4294901760
    %1372 = vmatpush1.msra.mxu0 %v1371
    %v1373 = vand.u32 %v674, 4294901760
    %v1374 = vsub.f32 %v674, %v1373
    %v1375 = vand.u32 %v1374, 4294901760
    %1376 = vmatprep.subr.mxu0 %v1375
    %v1377 = vand.u32 %v673, 4294901760
    %v1378 = vsub.f32 %v673, %v1377
    %v1379 = vand.u32 %v1378, 4294901760
    %1380 = vmatpush1.msra.mxu0 %v1379
    %v1381 = vand.u32 %v672, 4294901760
    %v1382 = vsub.f32 %v672, %v1381
    %v1383 = vand.u32 %v1382, 4294901760
    %1384 = vmatprep.subr.mxu0 %v1383
    %v1385 = vand.u32 %v671, 4294901760
    %v1386 = vsub.f32 %v671, %v1385
    %v1387 = vand.u32 %v1386, 4294901760
    %1388 = vmatpush1.msra.mxu0 %v1387
    %v1389 = vand.u32 %v670, 4294901760
    %v1390 = vsub.f32 %v670, %v1389
    %v1391 = vand.u32 %v1390, 4294901760
    %1392 = vmatprep.subr.mxu0 %v1391
    %v1393 = vand.u32 %v669, 4294901760
    %v1394 = vsub.f32 %v669, %v1393
    %v1395 = vand.u32 %v1394, 4294901760
    %1396 = vmatpush1.msra.mxu0 %v1395
    %v1397 = vand.u32 %v668, 4294901760
    %v1398 = vsub.f32 %v668, %v1397
    %v1399 = vand.u32 %v1398, 4294901760
    %1400 = vmatprep.subr.mxu0 %v1399
    %v1401 = vand.u32 %v667, 4294901760
    %v1402 = vsub.f32 %v667, %v1401
    %v1403 = vand.u32 %v1402, 4294901760
    %1404 = vmatpush1.msra.mxu0 %v1403
    %v1405 = vand.u32 %v666, 4294901760
    %v1406 = vsub.f32 %v666, %v1405
    %v1407 = vand.u32 %v1406, 4294901760
    %1408 = vmatprep.subr.mxu0 %v1407
    %v1409 = vand.u32 %v665, 4294901760
    %v1410 = vsub.f32 %v665, %v1409
    %v1411 = vand.u32 %v1410, 4294901760
    %1412 = vmatpush1.msra.mxu0 %v1411
    %v1413 = vand.u32 %v664, 4294901760
    %v1414 = vsub.f32 %v664, %v1413
    %v1415 = vand.u32 %v1414, 4294901760
    %1416 = vmatprep.subr.mxu0 %v1415
    %v1417 = vand.u32 %v663, 4294901760
    %v1418 = vsub.f32 %v663, %v1417
    %v1419 = vand.u32 %v1418, 4294901760
    %1420 = vmatpush1.msra.mxu0 %v1419
    %v1421 = vand.u32 %v662, 4294901760
    %v1422 = vsub.f32 %v662, %v1421
    %v1423 = vand.u32 %v1422, 4294901760
    %1424 = vmatprep.subr.mxu0 %v1423
    %v1425 = vand.u32 %v661, 4294901760
    %v1426 = vsub.f32 %v661, %v1425
    %v1427 = vand.u32 %v1426, 4294901760
    %1428 = vmatpush1.msra.mxu0 %v1427
    %v1429 = vand.u32 %v660, 4294901760
    %v1430 = vsub.f32 %v660, %v1429
    %v1431 = vand.u32 %v1430, 4294901760
    %1432 = vmatprep.subr.mxu0 %v1431
    %v1433 = vand.u32 %v659, 4294901760
    %v1434 = vsub.f32 %v659, %v1433
    %v1435 = vand.u32 %v1434, 4294901760
    %1436 = vmatpush1.msra.mxu0 %v1435
    %v1437 = vand.u32 %v658, 4294901760
    %v1438 = vsub.f32 %v658, %v1437
    %v1439 = vand.u32 %v1438, 4294901760
    %1440 = vmatprep.subr.mxu0 %v1439
    %v1441 = vand.u32 %v657, 4294901760
    %v1442 = vsub.f32 %v657, %v1441
    %v1443 = vand.u32 %v1442, 4294901760
    %1444 = vmatpush1.msra.mxu0 %v1443
    %v1445 = vand.u32 %v656, 4294901760
    %v1446 = vsub.f32 %v656, %v1445
    %v1447 = vand.u32 %v1446, 4294901760
    %1448 = vmatprep.subr.mxu0 %v1447
    %v1449 = vand.u32 %v655, 4294901760
    %v1450 = vsub.f32 %v655, %v1449
    %v1451 = vand.u32 %v1450, 4294901760
    %1452 = vmatpush1.msra.mxu0 %v1451
    %1453 = vmatprep.subr.mxu0 0.0
    %1454 = vmatpush2.msra.mxu0 0.0
    %1455 = vmatprep.subr.mxu0 0.0
    %1456 = vmatpush2.msra.mxu0 0.0
    %1457 = vmatprep.subr.mxu0 0.0
    %1458 = vmatpush2.msra.mxu0 0.0
    %1459 = vmatprep.subr.mxu0 0.0
    %1460 = vmatpush2.msra.mxu0 0.0
    %1461 = vmatprep.subr.mxu0 0.0
    %1462 = vmatpush2.msra.mxu0 0.0
    %1463 = vmatprep.subr.mxu0 0.0
    %1464 = vmatpush2.msra.mxu0 0.0
    %1465 = vmatprep.subr.mxu0 0.0
    %1466 = vmatpush2.msra.mxu0 0.0
    %1467 = vmatprep.subr.mxu0 0.0
    %1468 = vmatpush2.msra.mxu0 0.0
    %1469 = vmatprep.subr.mxu0 0.0
    %1470 = vmatpush2.msra.mxu0 0.0
    %1471 = vmatprep.subr.mxu0 0.0
    %1472 = vmatpush2.msra.mxu0 0.0
    %1473 = vmatprep.subr.mxu0 0.0
    %1474 = vmatpush2.msra.mxu0 0.0
    %1475 = vmatprep.subr.mxu0 0.0
    %1476 = vmatpush2.msra.mxu0 0.0
    %1477 = vmatprep.subr.mxu0 0.0
    %1478 = vmatpush2.msra.mxu0 0.0
    %1479 = vmatprep.subr.mxu0 0.0
    %1480 = vmatpush2.msra.mxu0 0.0
    %1481 = vmatprep.subr.mxu0 0.0
    %1482 = vmatpush2.msra.mxu0 0.0
    %1483 = vmatprep.subr.mxu0 0.0
    %1484 = vmatpush2.msra.mxu0 0.0
    %1485 = vmatprep.mubr.f32.mxu0 0.0
    %v1486 = vand.u32 %v653, 4294901760
    %1487 = vmatmul.mubr.f32.gmra.mxu0 %v1486
    %v1488 = vpop.f32.mrf.mxu0
    %v1489 = vadd.f32 %v1312, %v1488
    %v1490 = vpop.f32.mrf.mxu0
    %v1491 = vadd.f32 %v1314, %v1490
    %1492 = vmatprep.mubr.f32.mxu0 0.0
    %v1493 = vand.u32 %v654, 4294901760
    %1494 = vmatmul.mubr.f32.gmra.mxu0 %v1493
    %v1495 = vpop.f32.mrf.mxu0
    %v1496 = vadd.f32 %v1321, %v1495
    %v1497 = vpop.f32.mrf.mxu0
    %v1498 = vadd.f32 %v1323, %v1497
    %1499 = vdwg.mxu0
    %v1500 = vand.u32 %v686, 4294901760
    %1501 = vmatprep.subr.mxu0 %v1500
    %v1502 = vand.u32 %v685, 4294901760
    %1503 = vmatpush1.msra.mxu0 %v1502
    %v1504 = vand.u32 %v684, 4294901760
    %1505 = vmatprep.subr.mxu0 %v1504
    %v1506 = vand.u32 %v683, 4294901760
    %1507 = vmatpush1.msra.mxu0 %v1506
    %v1508 = vand.u32 %v682, 4294901760
    %1509 = vmatprep.subr.mxu0 %v1508
    %v1510 = vand.u32 %v681, 4294901760
    %1511 = vmatpush1.msra.mxu0 %v1510
    %v1512 = vand.u32 %v680, 4294901760
    %1513 = vmatprep.subr.mxu0 %v1512
    %v1514 = vand.u32 %v679, 4294901760
    %1515 = vmatpush1.msra.mxu0 %v1514
    %v1516 = vand.u32 %v678, 4294901760
    %1517 = vmatprep.subr.mxu0 %v1516
    %v1518 = vand.u32 %v677, 4294901760
    %1519 = vmatpush1.msra.mxu0 %v1518
    %v1520 = vand.u32 %v676, 4294901760
    %1521 = vmatprep.subr.mxu0 %v1520
    %v1522 = vand.u32 %v675, 4294901760
    %1523 = vmatpush1.msra.mxu0 %v1522
    %v1524 = vand.u32 %v674, 4294901760
    %1525 = vmatprep.subr.mxu0 %v1524
    %v1526 = vand.u32 %v673, 4294901760
    %1527 = vmatpush1.msra.mxu0 %v1526
    %v1528 = vand.u32 %v672, 4294901760
    %1529 = vmatprep.subr.mxu0 %v1528
    %v1530 = vand.u32 %v671, 4294901760
    %1531 = vmatpush1.msra.mxu0 %v1530
    %v1532 = vand.u32 %v670, 4294901760
    %1533 = vmatprep.subr.mxu0 %v1532
    %v1534 = vand.u32 %v669, 4294901760
    %1535 = vmatpush1.msra.mxu0 %v1534
    %v1536 = vand.u32 %v668, 4294901760
    %1537 = vmatprep.subr.mxu0 %v1536
    %v1538 = vand.u32 %v667, 4294901760
    %1539 = vmatpush1.msra.mxu0 %v1538
    %v1540 = vand.u32 %v666, 4294901760
    %1541 = vmatprep.subr.mxu0 %v1540
    %v1542 = vand.u32 %v665, 4294901760
    %1543 = vmatpush1.msra.mxu0 %v1542
    %v1544 = vand.u32 %v664, 4294901760
    %1545 = vmatprep.subr.mxu0 %v1544
    %v1546 = vand.u32 %v663, 4294901760
    %1547 = vmatpush1.msra.mxu0 %v1546
    %v1548 = vand.u32 %v662, 4294901760
    %1549 = vmatprep.subr.mxu0 %v1548
    %v1550 = vand.u32 %v661, 4294901760
    %1551 = vmatpush1.msra.mxu0 %v1550
    %v1552 = vand.u32 %v660, 4294901760
    %1553 = vmatprep.subr.mxu0 %v1552
    %v1554 = vand.u32 %v659, 4294901760
    %1555 = vmatpush1.msra.mxu0 %v1554
    %v1556 = vand.u32 %v658, 4294901760
    %1557 = vmatprep.subr.mxu0 %v1556
    %v1558 = vand.u32 %v657, 4294901760
    %1559 = vmatpush1.msra.mxu0 %v1558
    %v1560 = vand.u32 %v656, 4294901760
    %1561 = vmatprep.subr.mxu0 %v1560
    %v1562 = vand.u32 %v655, 4294901760
    %1563 = vmatpush1.msra.mxu0 %v1562
    %1564 = vmatprep.subr.mxu0 0.0
    %1565 = vmatpush2.msra.mxu0 0.0
    %1566 = vmatprep.subr.mxu0 0.0
    %1567 = vmatpush2.msra.mxu0 0.0
    %1568 = vmatprep.subr.mxu0 0.0
    %1569 = vmatpush2.msra.mxu0 0.0
    %1570 = vmatprep.subr.mxu0 0.0
    %1571 = vmatpush2.msra.mxu0 0.0
    %1572 = vmatprep.subr.mxu0 0.0
    %1573 = vmatpush2.msra.mxu0 0.0
    %1574 = vmatprep.subr.mxu0 0.0
    %1575 = vmatpush2.msra.mxu0 0.0
    %1576 = vmatprep.subr.mxu0 0.0
    %1577 = vmatpush2.msra.mxu0 0.0
    %1578 = vmatprep.subr.mxu0 0.0
    %1579 = vmatpush2.msra.mxu0 0.0
    %1580 = vmatprep.subr.mxu0 0.0
    %1581 = vmatpush2.msra.mxu0 0.0
    %1582 = vmatprep.subr.mxu0 0.0
    %1583 = vmatpush2.msra.mxu0 0.0
    %1584 = vmatprep.subr.mxu0 0.0
    %1585 = vmatpush2.msra.mxu0 0.0
    %1586 = vmatprep.subr.mxu0 0.0
    %1587 = vmatpush2.msra.mxu0 0.0
    %1588 = vmatprep.subr.mxu0 0.0
    %1589 = vmatpush2.msra.mxu0 0.0
    %1590 = vmatprep.subr.mxu0 0.0
    %1591 = vmatpush2.msra.mxu0 0.0
    %1592 = vmatprep.subr.mxu0 0.0
    %1593 = vmatpush2.msra.mxu0 0.0
    %1594 = vmatprep.subr.mxu0 0.0
    %1595 = vmatpush2.msra.mxu0 0.0
    %1596 = vmatprep.mubr.f32.mxu0 0.0
    %v1597 = vand.u32 %v653, 4294901760
    %1598 = vmatmul.mubr.f32.gmra.mxu0 %v1597
    %v1599 = vpop.f32.mrf.mxu0
    %v1600 = vadd.f32 %v1489, %v1599
    %v1601 = vpop.f32.mrf.mxu0
    %v1602 = vadd.f32 %v1491, %v1601
    %1603 = vmatprep.mubr.f32.mxu0 0.0
    %v1604 = vand.u32 %v654, 4294901760
    %1605 = vmatmul.mubr.f32.gmra.mxu0 %v1604
    %v1606 = vpop.f32.mrf.mxu0
    %v1607 = vadd.f32 %v1496, %v1606
    %v1608 = vpop.f32.mrf.mxu0
    %v1609 = vadd.f32 %v1498, %v1608
    %1610 = vdwg.mxu0
    %v1611 = vadd.f32 %v1600, %v1602
    %1612 = vadd.xlane.f32.xlu0 %v1611
    %v1613 = vpop.xlane.xlu0 %1612
    %v1614 = vadd.f32 %v1607, %v1609
    %1615 = vadd.xlane.f32.xlu0 %v1614
    %v1616 = vpop.xlane.xlu0 %1615
    %v1617 = vrcp.pop 256.0
    %v1618 = vmul.f32 %v1613, %v1617
    %v1619 = vmul.f32 %v1616, %v1617
    %v1620 = vsub.f32 %v1600, %v1618
    %v1621 = vsub.f32 %v1602, %v1618
    %v1622 = vsub.f32 %v1607, %v1619
    %v1623 = vsub.f32 %v1609, %v1619
    %v1624 = vmul.f32 %v1620, %v1620
    %v1625 = vmul.f32 %v1621, %v1621
    %v1626 = vmul.f32 %v1622, %v1622
    %v1627 = vmul.f32 %v1623, %v1623
    %v1628 = vadd.f32 %v1624, %v1625
    %1629 = vadd.xlane.f32.xlu0 %v1628
    %v1630 = vpop.xlane.xlu0 %1629
    %v1631 = vadd.f32 %v1626, %v1627
    %1632 = vadd.xlane.f32.xlu0 %v1631
    %v1633 = vpop.xlane.xlu0 %1632
    %v1634 = vmul.f32 %v1630, %v1617
    %v1635 = vmul.f32 %v1633, %v1617
    %v1636 = vadd.f32 %v1634, 1e-05
    %v1637 = vadd.f32 %v1635, 1e-05
    %v1638 = vrsqrt.pop %v1636
    %v1639 = vrsqrt.pop %v1637
    %v1640 = vmul.f32 %v1620, %v1638
    %v1641 = vmul.f32 %v1621, %v1638
    %v1642 = vmul.f32 %v1622, %v1639
    %v1643 = vmul.f32 %v1623, %v1639
    %v1644 = vlaneseq
    %v1645 = vshrl.u32 %v1644, 7
    %v1646 = vsub.s32 1, %v1645
    %v1647 = vrot.slane %v687, %v1646
    %v1648 = vlaneseq
    %v1649 = vshrl.u32 %v1648, 7
    %v1650 = vsub.s32 5, %v1649
    %v1651 = vrot.slane %v687, %v1650
    %v1654 = vlaneseq
    %v1655 = vshrl.u32 %v1654, 7
    %v1656 = vsub.s32 1, %v1655
    %v1657 = vrot.slane %v1647, %v1656
    %v1658 = vlaneseq
    %v1659 = vshrl.u32 %v1658, 7
    %v1660 = vsub.s32 1, %v1659
    %v1661 = vrot.slane %v1651, %v1660
    %v1662 = vmul.f32 %v1640, %v1657
    %v1663 = vmul.f32 %v1641, %v1661
    %v1664 = vmul.f32 %v1642, %v1657
    %v1665 = vmul.f32 %v1643, %v1661
    %v1666 = vlaneseq
    %v1667 = vshrl.u32 %v1666, 7
    %v1668 = vsub.s32 2, %v1667
    %v1669 = vrot.slane %v687, %v1668
    %v1670 = vlaneseq
    %v1671 = vshrl.u32 %v1670, 7
    %v1672 = vsub.s32 6, %v1671
    %v1673 = vrot.slane %v687, %v1672
    %v1676 = vlaneseq
    %v1677 = vshrl.u32 %v1676, 7
    %v1678 = vsub.s32 2, %v1677
    %v1679 = vrot.slane %v1669, %v1678
    %v1680 = vlaneseq
    %v1681 = vshrl.u32 %v1680, 7
    %v1682 = vsub.s32 2, %v1681
    %v1683 = vrot.slane %v1673, %v1682
    %v1684 = vadd.f32 %v1662, %v1679
    %v1685 = vadd.f32 %v1663, %v1683
    %v1686 = vadd.f32 %v1664, %v1679
    %v1687 = vadd.f32 %v1665, %v1683
    %1688 = vst [vmem:[#allocation10] sm:$0xff] %v1684
    %1689 = vst [vmem:[#allocation10 + $0x8] sm:$0xff] %v1685
    %1690 = vst [vmem:[#allocation10 + $0x10] sm:$0xff] %v1686
    %1691 = vst [vmem:[#allocation10 + $0x18] sm:$0xff] %v1687
    // Predicated region
    $region38: #{tpu_custom_call.1} parent=1 // pred_check
      _
    $region39: #{tpu_custom_call.1} parent=1 // pred_check_branch
      %1693 = sbr.rel (0) target = $region41
    $region40: #{tpu_custom_call.1} parent=1 // pred_region
      %s1695 = ssub.s32 512, 512
      %1696 = vsyncadd [#allocation4], %s1695
      %s1697 = sshll.u32 [#allocation10], 4
      %s1698 = int_to_ptr.vmem [resolvable:$true] %s1697
      %1703 = dma.vmem_to_hbm [thread:$0]  %s1698, 512, %s5, [#allocation4], 256, 256, 16
    $region41: #{tpu_custom_call.1} parent=1 // pred_fallthru
      _
    // Predicated region
    $region42: #{tpu_custom_call.1} parent=1 // pred_check
      _
    $region43: #{tpu_custom_call.1} parent=1 // pred_check_branch
      %1705 = sbr.rel (0) target = $region45
    $region44: #{tpu_custom_call.1} parent=1 // pred_region
      %1706 = dma.done [#allocation4], 512
    $region45: #{tpu_custom_call.1} parent=1 // pred_fallthru
      _
    %1707 = vsyncpa [#allocation3], 1
    %1708 = vsyncpa [#allocation6], 1
    %1709 = vsyncpa [#allocation9], 1
    %1710 = vsyncpa [#allocation4], 1

</llo_original>
